<compile_context>
chip_gen: v7x
topology: tpu7x:2x2x1
jax: 0.10.0
libtpu: 0.0.40
codegen_flags: <defaults>
</compile_context>

<pallas_src>
import functools

import jax
import jax.numpy as jnp
from jax.experimental import pallas as pl
from jax.experimental.pallas import tpu as pltpu


def _round_up(n, m):
    return ((n + m - 1) // m) * m


def rnn_kernel(num_layers, *refs):
    """Ref layout:
      inputs : xt_ref, [w_ih_l, w_hh_l, b_l] * num_layers, w_fc, b_fc
      output : out_ref
      scratch: 1 or 2 sequence buffers of shape (T, Bt, Hp) f32 (ping-pong)

    xt_ref : (T, Bt, Dp)  time-major, zero-padded, bf16, VMEM resident
    w_ih_l : (in_pad, Hp) bf16    w_hh_l: (Hp, Hp) bf16    b_l: (1, Hp) f32
    w_fc   : (Hp, Cp) bf16        b_fc  : (1, Cp) f32
    out_ref: (Bt, Cp) f32
    """
    n_in = 1 + 3 * num_layers + 2
    xt_ref = refs[0]
    layer_refs = refs[1:1 + 3 * num_layers]
    w_fc_ref = refs[n_in - 2]
    b_fc_ref = refs[n_in - 1]
    out_ref = refs[n_in]
    bufs = refs[n_in + 1:]

    seq_len, bt, _ = xt_ref.shape
    h_pad = bufs[0].shape[-1]

    in_ref = xt_ref
    h_last = jnp.zeros((bt, h_pad), jnp.float32)
    for l in range(num_layers):
        w_ih = layer_refs[3 * l][...]        # (in_pad, Hp) bf16
        w_hh = layer_refs[3 * l + 1][...]    # (Hp, Hp)     bf16
        bias = layer_refs[3 * l + 2][...]    # (1, Hp)      f32
        out_buf = bufs[l % len(bufs)]

        # (1) Input projection for ALL time steps as one big GEMM: real MXU M
        #     dimension, amortizes fill/drain, bias added once outside the loop.
        in_pad = in_ref.shape[-1]
        x_all = in_ref[...].reshape(seq_len * bt, in_pad)
        if x_all.dtype != jnp.bfloat16:
            x_all = x_all.astype(jnp.bfloat16)
        proj = jnp.dot(x_all, w_ih, preferred_element_type=jnp.float32) + bias
        out_buf[...] = proj.reshape(seq_len, bt, h_pad)

        # (2) Recurrence: only a (Bt,Hp)@(Hp,Hp) matmul + tanh per step;
        #     h_t overwrites proj_t in place so the buffer becomes this layer's
        #     output sequence (input of the next layer's big GEMM).
        def step(t, h, w_hh=w_hh, out_buf=out_buf):
            hh = jnp.dot(h.astype(jnp.bfloat16), w_hh,
                         preferred_element_type=jnp.float32)
            h_new = jnp.tanh(out_buf[t] + hh)   # f32 add/tanh (v5e-safe)
            out_buf[t] = h_new
            return h_new

        h0 = jnp.zeros((bt, h_pad), jnp.float32)
        unroll = seq_len if seq_len <= 8 else 8
        h_last = jax.lax.fori_loop(0, seq_len, step, h0, unroll=unroll)
        in_ref = out_buf

    # Final Linear on the last time step's top-layer hidden state.
    out_ref[...] = (
        jnp.dot(h_last.astype(jnp.bfloat16), w_fc_ref[...],
                preferred_element_type=jnp.float32) + b_fc_ref[...]
    )


def init_params(key, input_size, hidden_size, num_layers, num_classes):
    """PyTorch-style U(-1/sqrt(H), 1/sqrt(H)) init; weights stored pre-transposed
    to (in_features, out_features) so everything is row-major x @ W."""
    k = 1.0 / (hidden_size ** 0.5)
    layers = []
    for layer in range(num_layers):
        in_dim = input_size if layer == 0 else hidden_size
        key, k1, k2, k3, k4 = jax.random.split(key, 5)
        w_ih = jax.random.uniform(k1, (in_dim, hidden_size), jnp.float32, -k, k)
        w_hh = jax.random.uniform(k2, (hidden_size, hidden_size), jnp.float32, -k, k)
        b_ih = jax.random.uniform(k3, (hidden_size,), jnp.float32, -k, k)
        b_hh = jax.random.uniform(k4, (hidden_size,), jnp.float32, -k, k)
        layers.append((w_ih, w_hh, b_ih, b_hh))
    key, k5, k6 = jax.random.split(key, 3)
    w_fc = jax.random.uniform(k5, (hidden_size, num_classes), jnp.float32, -k, k)
    b_fc = jax.random.uniform(k6, (1, num_classes), jnp.float32, -k, k)
    return {"layers": layers, "fc": (w_fc, b_fc)}


def prepare_kernel_params(params, input_size, hidden_size, num_classes):
    """One-time weight prep: zero-pad to (8,128) geometry, cast matmul weights
    to bf16 (biases stay f32).  Zero padding is numerically exact."""
    d_pad = _round_up(input_size, 128)
    h_pad = _round_up(hidden_size, 128)
    c_pad = _round_up(num_classes, 128)

    layers = []
    for li, (w_ih, w_hh, b_ih, b_hh) in enumerate(params["layers"]):
        in_dim = input_size if li == 0 else hidden_size
        in_pad = d_pad if li == 0 else h_pad
        w_ih_p = (jnp.zeros((in_pad, h_pad), jnp.float32)
                  .at[:in_dim, :hidden_size].set(w_ih)).astype(jnp.bfloat16)
        w_hh_p = (jnp.zeros((h_pad, h_pad), jnp.float32)
                  .at[:hidden_size, :hidden_size].set(w_hh)).astype(jnp.bfloat16)
        b_p = (jnp.zeros((1, h_pad), jnp.float32)
               .at[0, :hidden_size].set(b_ih + b_hh))
        layers.append((w_ih_p, w_hh_p, b_p))

    w_fc, b_fc = params["fc"]
    w_fc_p = (jnp.zeros((h_pad, c_pad), jnp.float32)
              .at[:hidden_size, :num_classes].set(w_fc)).astype(jnp.bfloat16)
    # b_fc has shape (1, num_classes): use a shape-matching 2-D update (bug fix).
    b_fc_p = jnp.zeros((1, c_pad), jnp.float32).at[:, :num_classes].set(b_fc)
    return {"layers": layers, "fc": (w_fc_p, b_fc_p)}


@functools.partial(jax.jit, static_argnames=("num_classes",))
def rnn_forward(x, kparams, *, num_classes):
    """x: (B, T, D) float32, batch_first — same convention as the nn.Module."""
    B, T, D = x.shape
    num_layers = len(kparams["layers"])
    h_pad = kparams["layers"][0][1].shape[0]          # W_hh is (Hp, Hp)
    w_fc, b_fc = kparams["fc"]
    c_pad = w_fc.shape[1]
    d_pad = _round_up(D, 128)

    # Batch tile: >= 8 sublanes, capped at 128 rows per grid step.
    btile = min(_round_up(B, 8), 128)
    b_pad = _round_up(B, btile)
    n_btiles = b_pad // btile

    # Time-major, zero-pad, bf16 (halves x VMEM residency and HBM->VMEM DMA).
    # TODO(synk): for long T, stream (chunk_T, Bt, D) slabs with make_async_copy
    # instead of whole-array residency and drop this wrapper transpose.
    xt = jnp.transpose(x, (1, 0, 2))
    xt = jnp.pad(xt, ((0, 0), (0, b_pad - B), (0, d_pad - D))).astype(jnp.bfloat16)

    flat_inputs = [xt]
    for w_ih, w_hh, b in kparams["layers"]:
        flat_inputs += [w_ih, w_hh, b]
    flat_inputs += [w_fc, b_fc]

    vmem_spec = pl.BlockSpec(memory_space=pltpu.MemorySpace.VMEM)
    in_specs = [pl.BlockSpec((T, btile, d_pad), lambda b: (0, b, 0))]
    in_specs += [vmem_spec] * (3 * num_layers + 2)
    out_specs = pl.BlockSpec((btile, c_pad), lambda b: (b, 0))

    num_bufs = 2 if num_layers > 1 else 1
    scratch_shapes = [pltpu.VMEM((T, btile, h_pad), jnp.float32)
                      for _ in range(num_bufs)]

    # VMEM budget: double-buffered x/out blocks + resident weights + scratch.
    weight_bytes = sum(int(w.size) * w.dtype.itemsize for w in flat_inputs[1:])
    x_block_bytes = T * btile * d_pad * 2
    out_block_bytes = btile * c_pad * 4
    scratch_bytes = num_bufs * T * btile * h_pad * 4
    resident = 2 * (x_block_bytes + out_block_bytes) + weight_bytes + scratch_bytes
    vmem_limit = int(min(max(2 * resident, 16 << 20), 64 << 20))

    # Advisory cost estimate so XLA schedules surrounding ops around this
    # long serial region.
    in_dims = [d_pad] + [h_pad] * (num_layers - 1)
    flops = 0
    for ind in in_dims:
        flops += 2 * T * b_pad * ind * h_pad          # input-projection GEMM
        flops += 2 * T * b_pad * h_pad * h_pad        # recurrent matmuls
    flops += 2 * b_pad * h_pad * c_pad                # final fc
    cost = pl.CostEstimate(
        flops=int(flops),
        transcendentals=int(num_layers * T * b_pad * h_pad),
        bytes_accessed=int(xt.size * 2 + weight_bytes + b_pad * c_pad * 4),
    )

    out_pad = pl.pallas_call(
        functools.partial(rnn_kernel, num_layers),
        out_shape=jax.ShapeDtypeStruct((b_pad, c_pad), jnp.float32),
        grid=(n_btiles,),
        in_specs=in_specs,
        out_specs=out_specs,
        scratch_shapes=scratch_shapes,
        compiler_params=pltpu.CompilerParams(
            dimension_semantics=("parallel",),
            vmem_limit_bytes=vmem_limit),
        cost_estimate=cost,
    )(*flat_inputs)
    return out_pad[:B, :num_classes]


def rnn_reference(x, params):
    """Pure-JAX f32 reference mirroring torch.nn.RNN(batch_first=True) + Linear."""
    B, T, _ = x.shape
    inp = x
    for (w_ih, w_hh, b_ih, b_hh) in params["layers"]:
        H = w_hh.shape[0]
        h = jnp.zeros((B, H), jnp.float32)
        outs = []
        for t in range(T):
            h = jnp.tanh(inp[:, t, :] @ w_ih + h @ w_hh + b_ih + b_hh)
            outs.append(h)
        inp = jnp.stack(outs, axis=1)
    w_fc, b_fc = params["fc"]
    return inp[:, -1, :] @ w_fc + b_fc


if __name__ == "__main__":
    input_size = 16
    hidden_size = 32
    num_layers = 2
    num_classes = 10
    batch = 2
    seq = 8

    key = jax.random.PRNGKey(0)
    key, xkey = jax.random.split(key)
    x = jax.random.normal(xkey, (batch, seq, input_size), jnp.float32)
    params = init_params(key, input_size, hidden_size, num_layers, num_classes)
    kparams = prepare_kernel_params(params, input_size, hidden_size, num_classes)

    out = rnn_forward(x, kparams, num_classes=num_classes)
    out = jax.block_until_ready(out)

    ref = rnn_reference(x, params)
    assert out.shape == (batch, num_classes), out.shape
    # bf16 matmul operands (f32 accumulation) -> relaxed tolerance vs f32 reference.
    assert jnp.allclose(out, ref, rtol=5e-2, atol=5e-2), (out, ref)
    print("KERNEL_OK")
</pallas_src>

<mosaic_0001>
module attributes {stable_mosaic.version = 11 : i64} {
  func.func @rnn_kernel(%arg0: i32, %arg1: memref<8x8x128xbf16, #tpu.memory_space<vmem>>, %arg2: memref<128x128xbf16, #tpu.memory_space<vmem>>, %arg3: memref<128x128xbf16, #tpu.memory_space<vmem>>, %arg4: memref<1x128xf32, #tpu.memory_space<vmem>>, %arg5: memref<128x128xbf16, #tpu.memory_space<vmem>>, %arg6: memref<128x128xbf16, #tpu.memory_space<vmem>>, %arg7: memref<1x128xf32, #tpu.memory_space<vmem>>, %arg8: memref<128x128xbf16, #tpu.memory_space<vmem>>, %arg9: memref<1x128xf32, #tpu.memory_space<vmem>>, %arg10: memref<8x128xf32, #tpu.memory_space<vmem>>, %arg11: memref<8x8x128xf32, #tpu.memory_space<vmem>>, %arg12: memref<8x8x128xf32, #tpu.memory_space<vmem>>) attributes {dimension_semantics = [#tpu.dimension_semantics<parallel>], iteration_bounds = array<i64: 1>, scalar_prefetch = 0 : i64, scratch_operands = 2 : i64, tpu.core_type = #tpu.core_type<tc>, window_params = [{transform_indices = @transform_0, window_bounds = array<i64: 8, 8, 128>}, {pipeline_mode = #tpu.pipeline_mode<synchronous>, transform_indices = @transform_1, window_bounds = array<i64: 128, 128>}, {pipeline_mode = #tpu.pipeline_mode<synchronous>, transform_indices = @transform_2, window_bounds = array<i64: 128, 128>}, {pipeline_mode = #tpu.pipeline_mode<synchronous>, transform_indices = @transform_3, window_bounds = array<i64: 1, 128>}, {pipeline_mode = #tpu.pipeline_mode<synchronous>, transform_indices = @transform_4, window_bounds = array<i64: 128, 128>}, {pipeline_mode = #tpu.pipeline_mode<synchronous>, transform_indices = @transform_5, window_bounds = array<i64: 128, 128>}, {pipeline_mode = #tpu.pipeline_mode<synchronous>, transform_indices = @transform_6, window_bounds = array<i64: 1, 128>}, {pipeline_mode = #tpu.pipeline_mode<synchronous>, transform_indices = @transform_7, window_bounds = array<i64: 128, 128>}, {pipeline_mode = #tpu.pipeline_mode<synchronous>, transform_indices = @transform_8, window_bounds = array<i64: 1, 128>}, {transform_indices = @transform_9, window_bounds = array<i64: 8, 128>}]} {
    %c0 = arith.constant 0 : index
    %c0_0 = arith.constant 0 : index
    %0 = vector.load %arg2[%c0, %c0_0] : memref<128x128xbf16, #tpu.memory_space<vmem>>, vector<128x128xbf16>
    %c0_1 = arith.constant 0 : index
    %c0_2 = arith.constant 0 : index
    %1 = vector.load %arg3[%c0_1, %c0_2] : memref<128x128xbf16, #tpu.memory_space<vmem>>, vector<128x128xbf16>
    %c0_3 = arith.constant 0 : index
    %c0_4 = arith.constant 0 : index
    %2 = vector.load %arg4[%c0_3, %c0_4] : memref<1x128xf32, #tpu.memory_space<vmem>>, vector<1x128xf32>
    %c0_5 = arith.constant 0 : index
    %c0_6 = arith.constant 0 : index
    %c0_7 = arith.constant 0 : index
    %3 = vector.load %arg1[%c0_5, %c0_6, %c0_7] : memref<8x8x128xbf16, #tpu.memory_space<vmem>>, vector<8x8x128xbf16>
    %4 = vector.shape_cast %3 : vector<8x8x128xbf16> to vector<64x128xbf16>
    %cst = arith.constant dense<0.000000e+00> : vector<64x128xf32>
    %5 = tpu.matmul %4, %0, %cst {dimension_numbers = #tpu.dot_dimension_numbers<[1], [0], [0], [1], [0, 0, 1, 1], [], []>} : vector<64x128xbf16>, vector<128x128xbf16>, vector<64x128xf32> -> vector<64x128xf32>
    %6 = vector.broadcast %2 : vector<1x128xf32> to vector<64x128xf32>
    %7 = arith.addf %5, %6 : vector<64x128xf32>
    %8 = vector.shape_cast %7 : vector<64x128xf32> to vector<8x8x128xf32>
    %c0_8 = arith.constant 0 : index
    %c0_9 = arith.constant 0 : index
    %c0_10 = arith.constant 0 : index
    %9 = vector.load %arg11[%c0_8, %c0_9, %c0_10] : memref<8x8x128xf32, #tpu.memory_space<vmem>>, vector<8x8x128xf32>
    tpu.vector_store %arg11[%c0_8, %c0_9, %c0_10], %8 {strides = array<i32>} : memref<8x8x128xf32, #tpu.memory_space<vmem>>, vector<8x8x128xf32>,
    %cst_11 = arith.constant 0.000000e+00 : f32
    %10 = vector.broadcast %cst_11 : f32 to vector<8x128xf32>
    %c0_i32 = arith.constant 0 : i32
    %11 = arith.truncf %10 : vector<8x128xf32> to vector<8x128xbf16>
    %cst_12 = arith.constant dense<0.000000e+00> : vector<8x128xf32>
    %12 = tpu.matmul %11, %1, %cst_12 {dimension_numbers = #tpu.dot_dimension_numbers<[1], [0], [0], [1], [0, 0, 1, 1], [], []>} : vector<8x128xbf16>, vector<128x128xbf16>, vector<8x128xf32> -> vector<8x128xf32>
    %13 = arith.index_cast %c0_i32 : i32 to index
    %c0_13 = arith.constant 0 : index
    %c0_14 = arith.constant 0 : index
    %14 = vector.load %arg11[%13, %c0_13, %c0_14] : memref<8x8x128xf32, #tpu.memory_space<vmem>>, vector<1x8x128xf32>
    %15 = vector.shape_cast %14 : vector<1x8x128xf32> to vector<8x128xf32>
    %16 = arith.addf %15, %12 : vector<8x128xf32>
    %17 = math.tanh %16 : vector<8x128xf32>
    %18 = arith.index_cast %c0_i32 : i32 to index
    %c0_15 = arith.constant 0 : index
    %c0_16 = arith.constant 0 : index
    %19 = vector.load %arg11[%18, %c0_15, %c0_16] : memref<8x8x128xf32, #tpu.memory_space<vmem>>, vector<1x8x128xf32>
    %20 = vector.shape_cast %19 : vector<1x8x128xf32> to vector<8x128xf32>
    %21 = vector.shape_cast %17 : vector<8x128xf32> to vector<1x8x128xf32>
    tpu.vector_store %arg11[%18, %c0_15, %c0_16], %21 {strides = array<i32>} : memref<8x8x128xf32, #tpu.memory_space<vmem>>, vector<1x8x128xf32>,
    %c1_i32 = arith.constant 1 : i32
    %22 = arith.truncf %17 : vector<8x128xf32> to vector<8x128xbf16>
    %cst_17 = arith.constant dense<0.000000e+00> : vector<8x128xf32>
    %23 = tpu.matmul %22, %1, %cst_17 {dimension_numbers = #tpu.dot_dimension_numbers<[1], [0], [0], [1], [0, 0, 1, 1], [], []>} : vector<8x128xbf16>, vector<128x128xbf16>, vector<8x128xf32> -> vector<8x128xf32>
    %24 = arith.index_cast %c1_i32 : i32 to index
    %c0_18 = arith.constant 0 : index
    %c0_19 = arith.constant 0 : index
    %25 = vector.load %arg11[%24, %c0_18, %c0_19] : memref<8x8x128xf32, #tpu.memory_space<vmem>>, vector<1x8x128xf32>
    %26 = vector.shape_cast %25 : vector<1x8x128xf32> to vector<8x128xf32>
    %27 = arith.addf %26, %23 : vector<8x128xf32>
    %28 = math.tanh %27 : vector<8x128xf32>
    %29 = arith.index_cast %c1_i32 : i32 to index
    %c0_20 = arith.constant 0 : index
    %c0_21 = arith.constant 0 : index
    %30 = vector.load %arg11[%29, %c0_20, %c0_21] : memref<8x8x128xf32, #tpu.memory_space<vmem>>, vector<1x8x128xf32>
    %31 = vector.shape_cast %30 : vector<1x8x128xf32> to vector<8x128xf32>
    %32 = vector.shape_cast %28 : vector<8x128xf32> to vector<1x8x128xf32>
    tpu.vector_store %arg11[%29, %c0_20, %c0_21], %32 {strides = array<i32>} : memref<8x8x128xf32, #tpu.memory_space<vmem>>, vector<1x8x128xf32>,
    %c2_i32 = arith.constant 2 : i32
    %33 = arith.truncf %28 : vector<8x128xf32> to vector<8x128xbf16>
    %cst_22 = arith.constant dense<0.000000e+00> : vector<8x128xf32>
    %34 = tpu.matmul %33, %1, %cst_22 {dimension_numbers = #tpu.dot_dimension_numbers<[1], [0], [0], [1], [0, 0, 1, 1], [], []>} : vector<8x128xbf16>, vector<128x128xbf16>, vector<8x128xf32> -> vector<8x128xf32>
    %35 = arith.index_cast %c2_i32 : i32 to index
    %c0_23 = arith.constant 0 : index
    %c0_24 = arith.constant 0 : index
    %36 = vector.load %arg11[%35, %c0_23, %c0_24] : memref<8x8x128xf32, #tpu.memory_space<vmem>>, vector<1x8x128xf32>
    %37 = vector.shape_cast %36 : vector<1x8x128xf32> to vector<8x128xf32>
    %38 = arith.addf %37, %34 : vector<8x128xf32>
    %39 = math.tanh %38 : vector<8x128xf32>
    %40 = arith.index_cast %c2_i32 : i32 to index
    %c0_25 = arith.constant 0 : index
    %c0_26 = arith.constant 0 : index
    %41 = vector.load %arg11[%40, %c0_25, %c0_26] : memref<8x8x128xf32, #tpu.memory_space<vmem>>, vector<1x8x128xf32>
    %42 = vector.shape_cast %41 : vector<1x8x128xf32> to vector<8x128xf32>
    %43 = vector.shape_cast %39 : vector<8x128xf32> to vector<1x8x128xf32>
    tpu.vector_store %arg11[%40, %c0_25, %c0_26], %43 {strides = array<i32>} : memref<8x8x128xf32, #tpu.memory_space<vmem>>, vector<1x8x128xf32>,
    %c3_i32 = arith.constant 3 : i32
    %44 = arith.truncf %39 : vector<8x128xf32> to vector<8x128xbf16>
    %cst_27 = arith.constant dense<0.000000e+00> : vector<8x128xf32>
    %45 = tpu.matmul %44, %1, %cst_27 {dimension_numbers = #tpu.dot_dimension_numbers<[1], [0], [0], [1], [0, 0, 1, 1], [], []>} : vector<8x128xbf16>, vector<128x128xbf16>, vector<8x128xf32> -> vector<8x128xf32>
    %46 = arith.index_cast %c3_i32 : i32 to index
    %c0_28 = arith.constant 0 : index
    %c0_29 = arith.constant 0 : index
    %47 = vector.load %arg11[%46, %c0_28, %c0_29] : memref<8x8x128xf32, #tpu.memory_space<vmem>>, vector<1x8x128xf32>
    %48 = vector.shape_cast %47 : vector<1x8x128xf32> to vector<8x128xf32>
    %49 = arith.addf %48, %45 : vector<8x128xf32>
    %50 = math.tanh %49 : vector<8x128xf32>
    %51 = arith.index_cast %c3_i32 : i32 to index
    %c0_30 = arith.constant 0 : index
    %c0_31 = arith.constant 0 : index
    %52 = vector.load %arg11[%51, %c0_30, %c0_31] : memref<8x8x128xf32, #tpu.memory_space<vmem>>, vector<1x8x128xf32>
    %53 = vector.shape_cast %52 : vector<1x8x128xf32> to vector<8x128xf32>
    %54 = vector.shape_cast %50 : vector<8x128xf32> to vector<1x8x128xf32>
    tpu.vector_store %arg11[%51, %c0_30, %c0_31], %54 {strides = array<i32>} : memref<8x8x128xf32, #tpu.memory_space<vmem>>, vector<1x8x128xf32>,
    %c4_i32 = arith.constant 4 : i32
    %55 = arith.truncf %50 : vector<8x128xf32> to vector<8x128xbf16>
    %cst_32 = arith.constant dense<0.000000e+00> : vector<8x128xf32>
    %56 = tpu.matmul %55, %1, %cst_32 {dimension_numbers = #tpu.dot_dimension_numbers<[1], [0], [0], [1], [0, 0, 1, 1], [], []>} : vector<8x128xbf16>, vector<128x128xbf16>, vector<8x128xf32> -> vector<8x128xf32>
    %57 = arith.index_cast %c4_i32 : i32 to index
    %c0_33 = arith.constant 0 : index
    %c0_34 = arith.constant 0 : index
    %58 = vector.load %arg11[%57, %c0_33, %c0_34] : memref<8x8x128xf32, #tpu.memory_space<vmem>>, vector<1x8x128xf32>
    %59 = vector.shape_cast %58 : vector<1x8x128xf32> to vector<8x128xf32>
    %60 = arith.addf %59, %56 : vector<8x128xf32>
    %61 = math.tanh %60 : vector<8x128xf32>
    %62 = arith.index_cast %c4_i32 : i32 to index
    %c0_35 = arith.constant 0 : index
    %c0_36 = arith.constant 0 : index
    %63 = vector.load %arg11[%62, %c0_35, %c0_36] : memref<8x8x128xf32, #tpu.memory_space<vmem>>, vector<1x8x128xf32>
    %64 = vector.shape_cast %63 : vector<1x8x128xf32> to vector<8x128xf32>
    %65 = vector.shape_cast %61 : vector<8x128xf32> to vector<1x8x128xf32>
    tpu.vector_store %arg11[%62, %c0_35, %c0_36], %65 {strides = array<i32>} : memref<8x8x128xf32, #tpu.memory_space<vmem>>, vector<1x8x128xf32>,
    %c5_i32 = arith.constant 5 : i32
    %66 = arith.truncf %61 : vector<8x128xf32> to vector<8x128xbf16>
    %cst_37 = arith.constant dense<0.000000e+00> : vector<8x128xf32>
    %67 = tpu.matmul %66, %1, %cst_37 {dimension_numbers = #tpu.dot_dimension_numbers<[1], [0], [0], [1], [0, 0, 1, 1], [], []>} : vector<8x128xbf16>, vector<128x128xbf16>, vector<8x128xf32> -> vector<8x128xf32>
    %68 = arith.index_cast %c5_i32 : i32 to index
    %c0_38 = arith.constant 0 : index
    %c0_39 = arith.constant 0 : index
    %69 = vector.load %arg11[%68, %c0_38, %c0_39] : memref<8x8x128xf32, #tpu.memory_space<vmem>>, vector<1x8x128xf32>
    %70 = vector.shape_cast %69 : vector<1x8x128xf32> to vector<8x128xf32>
    %71 = arith.addf %70, %67 : vector<8x128xf32>
    %72 = math.tanh %71 : vector<8x128xf32>
    %73 = arith.index_cast %c5_i32 : i32 to index
    %c0_40 = arith.constant 0 : index
    %c0_41 = arith.constant 0 : index
    %74 = vector.load %arg11[%73, %c0_40, %c0_41] : memref<8x8x128xf32, #tpu.memory_space<vmem>>, vector<1x8x128xf32>
    %75 = vector.shape_cast %74 : vector<1x8x128xf32> to vector<8x128xf32>
    %76 = vector.shape_cast %72 : vector<8x128xf32> to vector<1x8x128xf32>
    tpu.vector_store %arg11[%73, %c0_40, %c0_41], %76 {strides = array<i32>} : memref<8x8x128xf32, #tpu.memory_space<vmem>>, vector<1x8x128xf32>,
    %c6_i32 = arith.constant 6 : i32
    %77 = arith.truncf %72 : vector<8x128xf32> to vector<8x128xbf16>
    %cst_42 = arith.constant dense<0.000000e+00> : vector<8x128xf32>
    %78 = tpu.matmul %77, %1, %cst_42 {dimension_numbers = #tpu.dot_dimension_numbers<[1], [0], [0], [1], [0, 0, 1, 1], [], []>} : vector<8x128xbf16>, vector<128x128xbf16>, vector<8x128xf32> -> vector<8x128xf32>
    %79 = arith.index_cast %c6_i32 : i32 to index
    %c0_43 = arith.constant 0 : index
    %c0_44 = arith.constant 0 : index
    %80 = vector.load %arg11[%79, %c0_43, %c0_44] : memref<8x8x128xf32, #tpu.memory_space<vmem>>, vector<1x8x128xf32>
    %81 = vector.shape_cast %80 : vector<1x8x128xf32> to vector<8x128xf32>
    %82 = arith.addf %81, %78 : vector<8x128xf32>
    %83 = math.tanh %82 : vector<8x128xf32>
    %84 = arith.index_cast %c6_i32 : i32 to index
    %c0_45 = arith.constant 0 : index
    %c0_46 = arith.constant 0 : index
    %85 = vector.load %arg11[%84, %c0_45, %c0_46] : memref<8x8x128xf32, #tpu.memory_space<vmem>>, vector<1x8x128xf32>
    %86 = vector.shape_cast %85 : vector<1x8x128xf32> to vector<8x128xf32>
    %87 = vector.shape_cast %83 : vector<8x128xf32> to vector<1x8x128xf32>
    tpu.vector_store %arg11[%84, %c0_45, %c0_46], %87 {strides = array<i32>} : memref<8x8x128xf32, #tpu.memory_space<vmem>>, vector<1x8x128xf32>,
    %c7_i32 = arith.constant 7 : i32
    %88 = arith.truncf %83 : vector<8x128xf32> to vector<8x128xbf16>
    %cst_47 = arith.constant dense<0.000000e+00> : vector<8x128xf32>
    %89 = tpu.matmul %88, %1, %cst_47 {dimension_numbers = #tpu.dot_dimension_numbers<[1], [0], [0], [1], [0, 0, 1, 1], [], []>} : vector<8x128xbf16>, vector<128x128xbf16>, vector<8x128xf32> -> vector<8x128xf32>
    %90 = arith.index_cast %c7_i32 : i32 to index
    %c0_48 = arith.constant 0 : index
    %c0_49 = arith.constant 0 : index
    %91 = vector.load %arg11[%90, %c0_48, %c0_49] : memref<8x8x128xf32, #tpu.memory_space<vmem>>, vector<1x8x128xf32>
    %92 = vector.shape_cast %91 : vector<1x8x128xf32> to vector<8x128xf32>
    %93 = arith.addf %92, %89 : vector<8x128xf32>
    %94 = math.tanh %93 : vector<8x128xf32>
    %95 = arith.index_cast %c7_i32 : i32 to index
    %c0_50 = arith.constant 0 : index
    %c0_51 = arith.constant 0 : index
    %96 = vector.load %arg11[%95, %c0_50, %c0_51] : memref<8x8x128xf32, #tpu.memory_space<vmem>>, vector<1x8x128xf32>
    %97 = vector.shape_cast %96 : vector<1x8x128xf32> to vector<8x128xf32>
    %98 = vector.shape_cast %94 : vector<8x128xf32> to vector<1x8x128xf32>
    tpu.vector_store %arg11[%95, %c0_50, %c0_51], %98 {strides = array<i32>} : memref<8x8x128xf32, #tpu.memory_space<vmem>>, vector<1x8x128xf32>,
    %c8_i32 = arith.constant 8 : i32
    %c0_52 = arith.constant 0 : index
    %c0_53 = arith.constant 0 : index
    %99 = vector.load %arg5[%c0_52, %c0_53] : memref<128x128xbf16, #tpu.memory_space<vmem>>, vector<128x128xbf16>
    %c0_54 = arith.constant 0 : index
    %c0_55 = arith.constant 0 : index
    %100 = vector.load %arg6[%c0_54, %c0_55] : memref<128x128xbf16, #tpu.memory_space<vmem>>, vector<128x128xbf16>
    %c0_56 = arith.constant 0 : index
    %c0_57 = arith.constant 0 : index
    %101 = vector.load %arg7[%c0_56, %c0_57] : memref<1x128xf32, #tpu.memory_space<vmem>>, vector<1x128xf32>
    %c0_58 = arith.constant 0 : index
    %c0_59 = arith.constant 0 : index
    %c0_60 = arith.constant 0 : index
    %102 = vector.load %arg11[%c0_58, %c0_59, %c0_60] : memref<8x8x128xf32, #tpu.memory_space<vmem>>, vector<8x8x128xf32>
    %103 = vector.shape_cast %102 : vector<8x8x128xf32> to vector<64x128xf32>
    %104 = arith.truncf %103 : vector<64x128xf32> to vector<64x128xbf16>
    %cst_61 = arith.constant dense<0.000000e+00> : vector<64x128xf32>
    %105 = tpu.matmul %104, %99, %cst_61 {dimension_numbers = #tpu.dot_dimension_numbers<[1], [0], [0], [1], [0, 0, 1, 1], [], []>} : vector<64x128xbf16>, vector<128x128xbf16>, vector<64x128xf32> -> vector<64x128xf32>
    %106 = vector.broadcast %101 : vector<1x128xf32> to vector<64x128xf32>
    %107 = arith.addf %105, %106 : vector<64x128xf32>
    %108 = vector.shape_cast %107 : vector<64x128xf32> to vector<8x8x128xf32>
    %c0_62 = arith.constant 0 : index
    %c0_63 = arith.constant 0 : index
    %c0_64 = arith.constant 0 : index
    %109 = vector.load %arg12[%c0_62, %c0_63, %c0_64] : memref<8x8x128xf32, #tpu.memory_space<vmem>>, vector<8x8x128xf32>
    tpu.vector_store %arg12[%c0_62, %c0_63, %c0_64], %108 {strides = array<i32>} : memref<8x8x128xf32, #tpu.memory_space<vmem>>, vector<8x8x128xf32>,
    %cst_65 = arith.constant 0.000000e+00 : f32
    %110 = vector.broadcast %cst_65 : f32 to vector<8x128xf32>
    %c0_i32_66 = arith.constant 0 : i32
    %111 = arith.truncf %110 : vector<8x128xf32> to vector<8x128xbf16>
    %cst_67 = arith.constant dense<0.000000e+00> : vector<8x128xf32>
    %112 = tpu.matmul %111, %100, %cst_67 {dimension_numbers = #tpu.dot_dimension_numbers<[1], [0], [0], [1], [0, 0, 1, 1], [], []>} : vector<8x128xbf16>, vector<128x128xbf16>, vector<8x128xf32> -> vector<8x128xf32>
    %113 = arith.index_cast %c0_i32_66 : i32 to index
    %c0_68 = arith.constant 0 : index
    %c0_69 = arith.constant 0 : index
    %114 = vector.load %arg12[%113, %c0_68, %c0_69] : memref<8x8x128xf32, #tpu.memory_space<vmem>>, vector<1x8x128xf32>
    %115 = vector.shape_cast %114 : vector<1x8x128xf32> to vector<8x128xf32>
    %116 = arith.addf %115, %112 : vector<8x128xf32>
    %117 = math.tanh %116 : vector<8x128xf32>
    %118 = arith.index_cast %c0_i32_66 : i32 to index
    %c0_70 = arith.constant 0 : index
    %c0_71 = arith.constant 0 : index
    %119 = vector.load %arg12[%118, %c0_70, %c0_71] : memref<8x8x128xf32, #tpu.memory_space<vmem>>, vector<1x8x128xf32>
    %120 = vector.shape_cast %119 : vector<1x8x128xf32> to vector<8x128xf32>
    %121 = vector.shape_cast %117 : vector<8x128xf32> to vector<1x8x128xf32>
    tpu.vector_store %arg12[%118, %c0_70, %c0_71], %121 {strides = array<i32>} : memref<8x8x128xf32, #tpu.memory_space<vmem>>, vector<1x8x128xf32>,
    %c1_i32_72 = arith.constant 1 : i32
    %122 = arith.truncf %117 : vector<8x128xf32> to vector<8x128xbf16>
    %cst_73 = arith.constant dense<0.000000e+00> : vector<8x128xf32>
    %123 = tpu.matmul %122, %100, %cst_73 {dimension_numbers = #tpu.dot_dimension_numbers<[1], [0], [0], [1], [0, 0, 1, 1], [], []>} : vector<8x128xbf16>, vector<128x128xbf16>, vector<8x128xf32> -> vector<8x128xf32>
    %124 = arith.index_cast %c1_i32_72 : i32 to index
    %c0_74 = arith.constant 0 : index
    %c0_75 = arith.constant 0 : index
    %125 = vector.load %arg12[%124, %c0_74, %c0_75] : memref<8x8x128xf32, #tpu.memory_space<vmem>>, vector<1x8x128xf32>
    %126 = vector.shape_cast %125 : vector<1x8x128xf32> to vector<8x128xf32>
    %127 = arith.addf %126, %123 : vector<8x128xf32>
    %128 = math.tanh %127 : vector<8x128xf32>
    %129 = arith.index_cast %c1_i32_72 : i32 to index
    %c0_76 = arith.constant 0 : index
    %c0_77 = arith.constant 0 : index
    %130 = vector.load %arg12[%129, %c0_76, %c0_77] : memref<8x8x128xf32, #tpu.memory_space<vmem>>, vector<1x8x128xf32>
    %131 = vector.shape_cast %130 : vector<1x8x128xf32> to vector<8x128xf32>
    %132 = vector.shape_cast %128 : vector<8x128xf32> to vector<1x8x128xf32>
    tpu.vector_store %arg12[%129, %c0_76, %c0_77], %132 {strides = array<i32>} : memref<8x8x128xf32, #tpu.memory_space<vmem>>, vector<1x8x128xf32>,
    %c2_i32_78 = arith.constant 2 : i32
    %133 = arith.truncf %128 : vector<8x128xf32> to vector<8x128xbf16>
    %cst_79 = arith.constant dense<0.000000e+00> : vector<8x128xf32>
    %134 = tpu.matmul %133, %100, %cst_79 {dimension_numbers = #tpu.dot_dimension_numbers<[1], [0], [0], [1], [0, 0, 1, 1], [], []>} : vector<8x128xbf16>, vector<128x128xbf16>, vector<8x128xf32> -> vector<8x128xf32>
    %135 = arith.index_cast %c2_i32_78 : i32 to index
    %c0_80 = arith.constant 0 : index
    %c0_81 = arith.constant 0 : index
    %136 = vector.load %arg12[%135, %c0_80, %c0_81] : memref<8x8x128xf32, #tpu.memory_space<vmem>>, vector<1x8x128xf32>
    %137 = vector.shape_cast %136 : vector<1x8x128xf32> to vector<8x128xf32>
    %138 = arith.addf %137, %134 : vector<8x128xf32>
    %139 = math.tanh %138 : vector<8x128xf32>
    %140 = arith.index_cast %c2_i32_78 : i32 to index
    %c0_82 = arith.constant 0 : index
    %c0_83 = arith.constant 0 : index
    %141 = vector.load %arg12[%140, %c0_82, %c0_83] : memref<8x8x128xf32, #tpu.memory_space<vmem>>, vector<1x8x128xf32>
    %142 = vector.shape_cast %141 : vector<1x8x128xf32> to vector<8x128xf32>
    %143 = vector.shape_cast %139 : vector<8x128xf32> to vector<1x8x128xf32>
    tpu.vector_store %arg12[%140, %c0_82, %c0_83], %143 {strides = array<i32>} : memref<8x8x128xf32, #tpu.memory_space<vmem>>, vector<1x8x128xf32>,
    %c3_i32_84 = arith.constant 3 : i32
    %144 = arith.truncf %139 : vector<8x128xf32> to vector<8x128xbf16>
    %cst_85 = arith.constant dense<0.000000e+00> : vector<8x128xf32>
    %145 = tpu.matmul %144, %100, %cst_85 {dimension_numbers = #tpu.dot_dimension_numbers<[1], [0], [0], [1], [0, 0, 1, 1], [], []>} : vector<8x128xbf16>, vector<128x128xbf16>, vector<8x128xf32> -> vector<8x128xf32>
    %146 = arith.index_cast %c3_i32_84 : i32 to index
    %c0_86 = arith.constant 0 : index
    %c0_87 = arith.constant 0 : index
    %147 = vector.load %arg12[%146, %c0_86, %c0_87] : memref<8x8x128xf32, #tpu.memory_space<vmem>>, vector<1x8x128xf32>
    %148 = vector.shape_cast %147 : vector<1x8x128xf32> to vector<8x128xf32>
    %149 = arith.addf %148, %145 : vector<8x128xf32>
    %150 = math.tanh %149 : vector<8x128xf32>
    %151 = arith.index_cast %c3_i32_84 : i32 to index
    %c0_88 = arith.constant 0 : index
    %c0_89 = arith.constant 0 : index
    %152 = vector.load %arg12[%151, %c0_88, %c0_89] : memref<8x8x128xf32, #tpu.memory_space<vmem>>, vector<1x8x128xf32>
    %153 = vector.shape_cast %152 : vector<1x8x128xf32> to vector<8x128xf32>
    %154 = vector.shape_cast %150 : vector<8x128xf32> to vector<1x8x128xf32>
    tpu.vector_store %arg12[%151, %c0_88, %c0_89], %154 {strides = array<i32>} : memref<8x8x128xf32, #tpu.memory_space<vmem>>, vector<1x8x128xf32>,
    %c4_i32_90 = arith.constant 4 : i32
    %155 = arith.truncf %150 : vector<8x128xf32> to vector<8x128xbf16>
    %cst_91 = arith.constant dense<0.000000e+00> : vector<8x128xf32>
    %156 = tpu.matmul %155, %100, %cst_91 {dimension_numbers = #tpu.dot_dimension_numbers<[1], [0], [0], [1], [0, 0, 1, 1], [], []>} : vector<8x128xbf16>, vector<128x128xbf16>, vector<8x128xf32> -> vector<8x128xf32>
    %157 = arith.index_cast %c4_i32_90 : i32 to index
    %c0_92 = arith.constant 0 : index
    %c0_93 = arith.constant 0 : index
    %158 = vector.load %arg12[%157, %c0_92, %c0_93] : memref<8x8x128xf32, #tpu.memory_space<vmem>>, vector<1x8x128xf32>
    %159 = vector.shape_cast %158 : vector<1x8x128xf32> to vector<8x128xf32>
    %160 = arith.addf %159, %156 : vector<8x128xf32>
    %161 = math.tanh %160 : vector<8x128xf32>
    %162 = arith.index_cast %c4_i32_90 : i32 to index
    %c0_94 = arith.constant 0 : index
    %c0_95 = arith.constant 0 : index
    %163 = vector.load %arg12[%162, %c0_94, %c0_95] : memref<8x8x128xf32, #tpu.memory_space<vmem>>, vector<1x8x128xf32>
    %164 = vector.shape_cast %163 : vector<1x8x128xf32> to vector<8x128xf32>
    %165 = vector.shape_cast %161 : vector<8x128xf32> to vector<1x8x128xf32>
    tpu.vector_store %arg12[%162, %c0_94, %c0_95], %165 {strides = array<i32>} : memref<8x8x128xf32, #tpu.memory_space<vmem>>, vector<1x8x128xf32>,
    %c5_i32_96 = arith.constant 5 : i32
    %166 = arith.truncf %161 : vector<8x128xf32> to vector<8x128xbf16>
    %cst_97 = arith.constant dense<0.000000e+00> : vector<8x128xf32>
    %167 = tpu.matmul %166, %100, %cst_97 {dimension_numbers = #tpu.dot_dimension_numbers<[1], [0], [0], [1], [0, 0, 1, 1], [], []>} : vector<8x128xbf16>, vector<128x128xbf16>, vector<8x128xf32> -> vector<8x128xf32>
    %168 = arith.index_cast %c5_i32_96 : i32 to index
    %c0_98 = arith.constant 0 : index
    %c0_99 = arith.constant 0 : index
    %169 = vector.load %arg12[%168, %c0_98, %c0_99] : memref<8x8x128xf32, #tpu.memory_space<vmem>>, vector<1x8x128xf32>
    %170 = vector.shape_cast %169 : vector<1x8x128xf32> to vector<8x128xf32>
    %171 = arith.addf %170, %167 : vector<8x128xf32>
    %172 = math.tanh %171 : vector<8x128xf32>
    %173 = arith.index_cast %c5_i32_96 : i32 to index
    %c0_100 = arith.constant 0 : index
    %c0_101 = arith.constant 0 : index
    %174 = vector.load %arg12[%173, %c0_100, %c0_101] : memref<8x8x128xf32, #tpu.memory_space<vmem>>, vector<1x8x128xf32>
    %175 = vector.shape_cast %174 : vector<1x8x128xf32> to vector<8x128xf32>
    %176 = vector.shape_cast %172 : vector<8x128xf32> to vector<1x8x128xf32>
    tpu.vector_store %arg12[%173, %c0_100, %c0_101], %176 {strides = array<i32>} : memref<8x8x128xf32, #tpu.memory_space<vmem>>, vector<1x8x128xf32>,
    %c6_i32_102 = arith.constant 6 : i32
    %177 = arith.truncf %172 : vector<8x128xf32> to vector<8x128xbf16>
    %cst_103 = arith.constant dense<0.000000e+00> : vector<8x128xf32>
    %178 = tpu.matmul %177, %100, %cst_103 {dimension_numbers = #tpu.dot_dimension_numbers<[1], [0], [0], [1], [0, 0, 1, 1], [], []>} : vector<8x128xbf16>, vector<128x128xbf16>, vector<8x128xf32> -> vector<8x128xf32>
    %179 = arith.index_cast %c6_i32_102 : i32 to index
    %c0_104 = arith.constant 0 : index
    %c0_105 = arith.constant 0 : index
    %180 = vector.load %arg12[%179, %c0_104, %c0_105] : memref<8x8x128xf32, #tpu.memory_space<vmem>>, vector<1x8x128xf32>
    %181 = vector.shape_cast %180 : vector<1x8x128xf32> to vector<8x128xf32>
    %182 = arith.addf %181, %178 : vector<8x128xf32>
    %183 = math.tanh %182 : vector<8x128xf32>
    %184 = arith.index_cast %c6_i32_102 : i32 to index
    %c0_106 = arith.constant 0 : index
    %c0_107 = arith.constant 0 : index
    %185 = vector.load %arg12[%184, %c0_106, %c0_107] : memref<8x8x128xf32, #tpu.memory_space<vmem>>, vector<1x8x128xf32>
    %186 = vector.shape_cast %185 : vector<1x8x128xf32> to vector<8x128xf32>
    %187 = vector.shape_cast %183 : vector<8x128xf32> to vector<1x8x128xf32>
    tpu.vector_store %arg12[%184, %c0_106, %c0_107], %187 {strides = array<i32>} : memref<8x8x128xf32, #tpu.memory_space<vmem>>, vector<1x8x128xf32>,
    %c7_i32_108 = arith.constant 7 : i32
    %188 = arith.truncf %183 : vector<8x128xf32> to vector<8x128xbf16>
    %cst_109 = arith.constant dense<0.000000e+00> : vector<8x128xf32>
    %189 = tpu.matmul %188, %100, %cst_109 {dimension_numbers = #tpu.dot_dimension_numbers<[1], [0], [0], [1], [0, 0, 1, 1], [], []>} : vector<8x128xbf16>, vector<128x128xbf16>, vector<8x128xf32> -> vector<8x128xf32>
    %190 = arith.index_cast %c7_i32_108 : i32 to index
    %c0_110 = arith.constant 0 : index
    %c0_111 = arith.constant 0 : index
    %191 = vector.load %arg12[%190, %c0_110, %c0_111] : memref<8x8x128xf32, #tpu.memory_space<vmem>>, vector<1x8x128xf32>
    %192 = vector.shape_cast %191 : vector<1x8x128xf32> to vector<8x128xf32>
    %193 = arith.addf %192, %189 : vector<8x128xf32>
    %194 = math.tanh %193 : vector<8x128xf32>
    %195 = arith.index_cast %c7_i32_108 : i32 to index
    %c0_112 = arith.constant 0 : index
    %c0_113 = arith.constant 0 : index
    %196 = vector.load %arg12[%195, %c0_112, %c0_113] : memref<8x8x128xf32, #tpu.memory_space<vmem>>, vector<1x8x128xf32>
    %197 = vector.shape_cast %196 : vector<1x8x128xf32> to vector<8x128xf32>
    %198 = vector.shape_cast %194 : vector<8x128xf32> to vector<1x8x128xf32>
    tpu.vector_store %arg12[%195, %c0_112, %c0_113], %198 {strides = array<i32>} : memref<8x8x128xf32, #tpu.memory_space<vmem>>, vector<1x8x128xf32>,
    %c8_i32_114 = arith.constant 8 : i32
    %199 = arith.truncf %194 : vector<8x128xf32> to vector<8x128xbf16>
    %c0_115 = arith.constant 0 : index
    %c0_116 = arith.constant 0 : index
    %200 = vector.load %arg8[%c0_115, %c0_116] : memref<128x128xbf16, #tpu.memory_space<vmem>>, vector<128x128xbf16>
    %cst_117 = arith.constant dense<0.000000e+00> : vector<8x128xf32>
    %201 = tpu.matmul %199, %200, %cst_117 {dimension_numbers = #tpu.dot_dimension_numbers<[1], [0], [0], [1], [0, 0, 1, 1], [], []>} : vector<8x128xbf16>, vector<128x128xbf16>, vector<8x128xf32> -> vector<8x128xf32>
    %c0_118 = arith.constant 0 : index
    %c0_119 = arith.constant 0 : index
    %202 = vector.load %arg9[%c0_118, %c0_119] : memref<1x128xf32, #tpu.memory_space<vmem>>, vector<1x128xf32>
    %203 = vector.broadcast %202 : vector<1x128xf32> to vector<8x128xf32>
    %204 = arith.addf %201, %203 : vector<8x128xf32>
    %c0_120 = arith.constant 0 : index
    %c0_121 = arith.constant 0 : index
    %205 = vector.load %arg10[%c0_120, %c0_121] : memref<8x128xf32, #tpu.memory_space<vmem>>, vector<8x128xf32>
    tpu.vector_store %arg10[%c0_120, %c0_121], %204 {strides = array<i32>} : memref<8x128xf32, #tpu.memory_space<vmem>>, vector<8x128xf32>,
    return
  }
  func.func @transform_0(%arg0: i32) -> (i32, i32, i32) {
    %c0_i32 = arith.constant 0 : i32
    %c0_i32_0 = arith.constant 0 : i32
    %c0_i32_1 = arith.constant 0 : i32
    return %c0_i32, %arg0, %c0_i32_0 : i32, i32, i32
  }
  func.func @transform_1(%arg0: i32) -> (i32, i32) {
    %c0_i32 = arith.constant 0 : i32
    %c0_i32_0 = arith.constant 0 : i32
    %c0_i32_1 = arith.constant 0 : i32
    return %c0_i32, %c0_i32_0 : i32, i32
  }
  func.func @transform_2(%arg0: i32) -> (i32, i32) {
    %c0_i32 = arith.constant 0 : i32
    %c0_i32_0 = arith.constant 0 : i32
    %c0_i32_1 = arith.constant 0 : i32
    return %c0_i32, %c0_i32_0 : i32, i32
  }
  func.func @transform_3(%arg0: i32) -> (i32, i32) {
    %c0_i32 = arith.constant 0 : i32
    %c0_i32_0 = arith.constant 0 : i32
    %c0_i32_1 = arith.constant 0 : i32
    return %c0_i32, %c0_i32_0 : i32, i32
  }
  func.func @transform_4(%arg0: i32) -> (i32, i32) {
    %c0_i32 = arith.constant 0 : i32
    %c0_i32_0 = arith.constant 0 : i32
    %c0_i32_1 = arith.constant 0 : i32
    return %c0_i32, %c0_i32_0 : i32, i32
  }
  func.func @transform_5(%arg0: i32) -> (i32, i32) {
    %c0_i32 = arith.constant 0 : i32
    %c0_i32_0 = arith.constant 0 : i32
    %c0_i32_1 = arith.constant 0 : i32
    return %c0_i32, %c0_i32_0 : i32, i32
  }
  func.func @transform_6(%arg0: i32) -> (i32, i32) {
    %c0_i32 = arith.constant 0 : i32
    %c0_i32_0 = arith.constant 0 : i32
    %c0_i32_1 = arith.constant 0 : i32
    return %c0_i32, %c0_i32_0 : i32, i32
  }
  func.func @transform_7(%arg0: i32) -> (i32, i32) {
    %c0_i32 = arith.constant 0 : i32
    %c0_i32_0 = arith.constant 0 : i32
    %c0_i32_1 = arith.constant 0 : i32
    return %c0_i32, %c0_i32_0 : i32, i32
  }
  func.func @transform_8(%arg0: i32) -> (i32, i32) {
    %c0_i32 = arith.constant 0 : i32
    %c0_i32_0 = arith.constant 0 : i32
    %c0_i32_1 = arith.constant 0 : i32
    return %c0_i32, %c0_i32_0 : i32, i32
  }
  func.func @transform_9(%arg0: i32) -> (i32, i32) {
    %c0_i32 = arith.constant 0 : i32
    %c0_i32_0 = arith.constant 0 : i32
    return %arg0, %c0_i32 : i32, i32
  }
}

</mosaic_0001>

<llo_original>
// kernel: rnn_forward.1
$region0: #{rnn_forward.1}
  #allocation0 [shape = 'u32[]', space=smem, size = 0x4, offset = 0x4, fixed_abs, tag = 'smem constant byte address 0x4 - core index']
  #allocation1 [shape = 'u32[144,128]{1,0:T(1,128)}', space=vmem, size = 0x12000, scoped, tag = 'internal scratch']
  #allocation2 [shape = 'f32[8,8,128]{2,1,0:T(8,128)}', space=vmem, size = 0x8000, scoped, tag = 'scratch operand']
  #allocation3 [shape = 'f32[8,8,128]{2,1,0:T(8,128)}', space=vmem, size = 0x8000, scoped, tag = 'scratch operand']
  %s0 = inlined_call_operand.vmem [shape: bf16[8,8,128], index: 0, kind: input, shape index: {}]
  %s1 = inlined_call_operand.vmem [shape: bf16[128,128], index: 1, kind: input, shape index: {}]
  %s2 = inlined_call_operand.hbm [shape: bf16[128,128], index: 2, kind: input, shape index: {}]
  %s3 = inlined_call_operand.vmem [shape: f32[1,128], index: 3, kind: input, shape index: {}]
  %s4 = inlined_call_operand.hbm [shape: bf16[128,128], index: 4, kind: input, shape index: {}]
  %s5 = inlined_call_operand.hbm [shape: bf16[128,128], index: 5, kind: input, shape index: {}]
  %s6 = inlined_call_operand.vmem [shape: f32[1,128], index: 6, kind: input, shape index: {}]
  %s7 = inlined_call_operand.hbm [shape: bf16[128,128], index: 7, kind: input, shape index: {}]
  %s8 = inlined_call_operand.vmem [shape: f32[1,128], index: 8, kind: input, shape index: {}]
  %s9 = inlined_call_operand.vmem [shape: f32[8,128], index: 9, kind: output, shape index: {}]
  %s10 = sld [smem:[#allocation0]]
  $region62: #{rnn_forward.1} parent=0
    _
  %s12 = ssub.s32 1, %s10
  %s13 = scalar_select 0, %s12, %s10
  $region1: #{rnn_forward.1} parent=0
    #allocation4 [shape = 'u8[32768]{0}', space=vmem, size = 0x8000, scoped, tag = 'input window, operand 2, single buffered']
    #allocation5 [shape = 's32[1]{0}', space=sflag, size = 0x4, scoped, tag = 'scoped memory for rnn_forward.1']
    #allocation6 [shape = 'u8[32768]{0}', space=vmem, size = 0x8000, scoped, tag = 'input window, operand 4, single buffered']
    #allocation7 [shape = 's32[1]{0}', space=sflag, size = 0x4, scoped, tag = 'scoped memory for rnn_forward.1']
    #allocation8 [shape = 'u8[32768]{0}', space=vmem, size = 0x8000, scoped, tag = 'input window, operand 5, single buffered']
    #allocation9 [shape = 'u8[32768]{0}', space=vmem, size = 0x8000, scoped, tag = 'input window, operand 7, single buffered']
    #allocation10 [shape = 's32[1]{0}', space=sflag, size = 0x4, scoped, tag = 'scoped memory for rnn_forward.1']
    %14 = vsyncpa [#allocation5], 0
    %15 = vsyncpa [#allocation7], 0
    %16 = vsyncpa [#allocation10], 0
    // Predicated region
    $region2: #{rnn_forward.1} parent=1 // pred_check
      _
    $region3: #{rnn_forward.1} parent=1 // pred_check_branch
      %18 = sbr.rel (0) target = $region5
    $region4: #{rnn_forward.1} parent=1 // pred_region
      _
    $region5: #{rnn_forward.1} parent=1 // pred_fallthru
      _
    // Predicated region
    $region6: #{rnn_forward.1} parent=1 // pred_check
      _
    $region7: #{rnn_forward.1} parent=1 // pred_check_branch
      %20 = sbr.rel (0) target = $region9
    $region8: #{rnn_forward.1} parent=1 // pred_region
      _
    $region9: #{rnn_forward.1} parent=1 // pred_fallthru
      _
    // Predicated region
    $region10: #{rnn_forward.1} parent=1 // pred_check
      _
    $region11: #{rnn_forward.1} parent=1 // pred_check_branch
      %22 = sbr.rel (0) target = $region13
    $region12: #{rnn_forward.1} parent=1 // pred_region
      %s24 = ssub.s32 1024, 1024
      %25 = vsyncadd [#allocation5], %s24
      %s26 = sshll.u32 [#allocation4], 4
      %s27 = int_to_ptr.vmem [resolvable:$true] %s26
      %32 = dma.hbm_to_vmem [thread:$0]  %s2, 1024, %s27, [#allocation5], 64, 64, 4
    $region13: #{rnn_forward.1} parent=1 // pred_fallthru
      _
    // Predicated region
    $region14: #{rnn_forward.1} parent=1 // pred_check
      _
    $region15: #{rnn_forward.1} parent=1 // pred_check_branch
      %34 = sbr.rel (0) target = $region17
    $region16: #{rnn_forward.1} parent=1 // pred_region
      _
    $region17: #{rnn_forward.1} parent=1 // pred_fallthru
      _
    // Predicated region
    $region18: #{rnn_forward.1} parent=1 // pred_check
      _
    $region19: #{rnn_forward.1} parent=1 // pred_check_branch
      %36 = sbr.rel (0) target = $region21
    $region20: #{rnn_forward.1} parent=1 // pred_region
      %s38 = ssub.s32 1024, 1024
      %39 = vsyncadd [#allocation7], %s38
      %s40 = sshll.u32 [#allocation6], 4
      %s41 = int_to_ptr.vmem [resolvable:$true] %s40
      %46 = dma.hbm_to_vmem [thread:$0]  %s4, 1024, %s41, [#allocation7], 64, 64, 4
    $region21: #{rnn_forward.1} parent=1 // pred_fallthru
      _
    // Predicated region
    $region22: #{rnn_forward.1} parent=1 // pred_check
      _
    $region23: #{rnn_forward.1} parent=1 // pred_check_branch
      %48 = sbr.rel (0) target = $region25
    $region24: #{rnn_forward.1} parent=1 // pred_region
      %s50 = ssub.s32 1024, 1024
      %51 = vsyncadd [#allocation7], %s50
      %s52 = sshll.u32 [#allocation8], 4
      %s53 = int_to_ptr.vmem [resolvable:$true] %s52
      %58 = dma.hbm_to_vmem [thread:$0]  %s5, 1024, %s53, [#allocation7], 64, 64, 4
    $region25: #{rnn_forward.1} parent=1 // pred_fallthru
      _
    // Predicated region
    $region26: #{rnn_forward.1} parent=1 // pred_check
      _
    $region27: #{rnn_forward.1} parent=1 // pred_check_branch
      %60 = sbr.rel (0) target = $region29
    $region28: #{rnn_forward.1} parent=1 // pred_region
      _
    $region29: #{rnn_forward.1} parent=1 // pred_fallthru
      _
    // Predicated region
    $region30: #{rnn_forward.1} parent=1 // pred_check
      _
    $region31: #{rnn_forward.1} parent=1 // pred_check_branch
      %62 = sbr.rel (0) target = $region33
    $region32: #{rnn_forward.1} parent=1 // pred_region
      %s64 = ssub.s32 1024, 1024
      %65 = vsyncadd [#allocation10], %s64
      %s66 = sshll.u32 [#allocation9], 4
      %s67 = int_to_ptr.vmem [resolvable:$true] %s66
      %72 = dma.hbm_to_vmem [thread:$0]  %s7, 1024, %s67, [#allocation10], 64, 64, 4
    $region33: #{rnn_forward.1} parent=1 // pred_fallthru
      _
    // Predicated region
    $region34: #{rnn_forward.1} parent=1 // pred_check
      _
    $region35: #{rnn_forward.1} parent=1 // pred_check_branch
      %74 = sbr.rel (0) target = $region37
    $region36: #{rnn_forward.1} parent=1 // pred_region
      _
    $region37: #{rnn_forward.1} parent=1 // pred_fallthru
      _
    // Predicated region
    $region38: #{rnn_forward.1} parent=1 // pred_check
      _
    $region39: #{rnn_forward.1} parent=1 // pred_check_branch
      %76 = sbr.rel (0) target = $region41
    $region40: #{rnn_forward.1} parent=1 // pred_region
      %77 = dma.done [#allocation5], 1024
    $region41: #{rnn_forward.1} parent=1 // pred_fallthru
      _
    // Predicated region
    $region42: #{rnn_forward.1} parent=1 // pred_check
      _
    $region43: #{rnn_forward.1} parent=1 // pred_check_branch
      %79 = sbr.rel (0) target = $region45
    $region44: #{rnn_forward.1} parent=1 // pred_region
      %80 = dma.done [#allocation7], 1024
    $region45: #{rnn_forward.1} parent=1 // pred_fallthru
      _
    // Predicated region
    $region46: #{rnn_forward.1} parent=1 // pred_check
      _
    $region47: #{rnn_forward.1} parent=1 // pred_check_branch
      %82 = sbr.rel (0) target = $region49
    $region48: #{rnn_forward.1} parent=1 // pred_region
      %83 = dma.done [#allocation7], 1024
    $region49: #{rnn_forward.1} parent=1 // pred_fallthru
      _
    // Predicated region
    $region50: #{rnn_forward.1} parent=1 // pred_check
      _
    $region51: #{rnn_forward.1} parent=1 // pred_check_branch
      %85 = sbr.rel (0) target = $region53
    $region52: #{rnn_forward.1} parent=1 // pred_region
      %86 = dma.done [#allocation10], 1024
    $region53: #{rnn_forward.1} parent=1 // pred_fallthru
      _
    %v88 = vld [vmem:[%s1] sm:$0xf]
    %v89 = vld [vmem:[%s1 + $0x4] sm:$0xf]
    %v90 = vld [vmem:[%s1 + $0x8] sm:$0xf]
    %v91 = vld [vmem:[%s1 + $0xc] sm:$0xf]
    %v92 = vld [vmem:[%s1 + $0x10] sm:$0xf]
    %v93 = vld [vmem:[%s1 + $0x14] sm:$0xf]
    %v94 = vld [vmem:[%s1 + $0x18] sm:$0xf]
    %v95 = vld [vmem:[%s1 + $0x1c] sm:$0xf]
    %v96 = vld [vmem:[%s1 + $0x20] sm:$0xf]
    %v97 = vld [vmem:[%s1 + $0x24] sm:$0xf]
    %v98 = vld [vmem:[%s1 + $0x28] sm:$0xf]
    %v99 = vld [vmem:[%s1 + $0x2c] sm:$0xf]
    %v100 = vld [vmem:[%s1 + $0x30] sm:$0xf]
    %v101 = vld [vmem:[%s1 + $0x34] sm:$0xf]
    %v102 = vld [vmem:[%s1 + $0x38] sm:$0xf]
    %v103 = vld [vmem:[%s1 + $0x3c] sm:$0xf]
    %v104 = vld [vmem:[#allocation4] sm:$0xf]
    %v105 = vld [vmem:[#allocation4 + $0x4] sm:$0xf]
    %v106 = vld [vmem:[#allocation4 + $0x8] sm:$0xf]
    %v107 = vld [vmem:[#allocation4 + $0xc] sm:$0xf]
    %v108 = vld [vmem:[#allocation4 + $0x10] sm:$0xf]
    %v109 = vld [vmem:[#allocation4 + $0x14] sm:$0xf]
    %v110 = vld [vmem:[#allocation4 + $0x18] sm:$0xf]
    %v111 = vld [vmem:[#allocation4 + $0x1c] sm:$0xf]
    %v112 = vld [vmem:[#allocation4 + $0x20] sm:$0xf]
    %v113 = vld [vmem:[#allocation4 + $0x24] sm:$0xf]
    %v114 = vld [vmem:[#allocation4 + $0x28] sm:$0xf]
    %v115 = vld [vmem:[#allocation4 + $0x2c] sm:$0xf]
    %v116 = vld [vmem:[#allocation4 + $0x30] sm:$0xf]
    %v117 = vld [vmem:[#allocation4 + $0x34] sm:$0xf]
    %v118 = vld [vmem:[#allocation4 + $0x38] sm:$0xf]
    %v119 = vld [vmem:[#allocation4 + $0x3c] sm:$0xf]
    %v120 = vld [vmem:[%s3] sm:$0x1]
    %v121 = vld [vmem:[%s0] sm:$0xf]
    %v122 = vld [vmem:[%s0 + $0x4] sm:$0xf]
    %v123 = vld [vmem:[%s0 + $0x8] sm:$0xf]
    %v124 = vld [vmem:[%s0 + $0xc] sm:$0xf]
    %v125 = vld [vmem:[%s0 + $0x10] sm:$0xf]
    %v126 = vld [vmem:[%s0 + $0x14] sm:$0xf]
    %v127 = vld [vmem:[%s0 + $0x18] sm:$0xf]
    %v128 = vld [vmem:[%s0 + $0x1c] sm:$0xf]
    %v130 = vlaneseq
    %v131 = vshrl.u32 %v130, 7
    %v132 = vsub.s32 0, %v131
    %v133 = vrot.slane %v120, %v132
    %v143 = vunpack.c.l.b16 %v121
    %v144 = vunpack.c.l.b16 %v122
    %v145 = vunpack.c.l.b16 %v123
    %v146 = vunpack.c.l.b16 %v124
    %v147 = vunpack.c.l.b16 %v125
    %v148 = vunpack.c.l.b16 %v126
    %v149 = vunpack.c.l.b16 %v127
    %v150 = vunpack.c.l.b16 %v128
    %v151 = vpack.c.b16 %v144, %v143
    %v152 = vpack.c.b16 %v146, %v145
    %v153 = vpack.c.b16 %v148, %v147
    %v154 = vpack.c.b16 %v150, %v149
    %v175 = vunpack.c.l.b16 %v88
    %v176 = vunpack.c.l.b16 %v89
    %v177 = vunpack.c.l.b16 %v90
    %v178 = vunpack.c.l.b16 %v91
    %v179 = vunpack.c.l.b16 %v92
    %v180 = vunpack.c.l.b16 %v93
    %v181 = vunpack.c.l.b16 %v94
    %v182 = vunpack.c.l.b16 %v95
    %v183 = vunpack.c.l.b16 %v96
    %v184 = vunpack.c.l.b16 %v97
    %v185 = vunpack.c.l.b16 %v98
    %v186 = vunpack.c.l.b16 %v99
    %v187 = vunpack.c.l.b16 %v100
    %v188 = vunpack.c.l.b16 %v101
    %v189 = vunpack.c.l.b16 %v102
    %v190 = vunpack.c.l.b16 %v103
    %v191 = vpack.c.b16 %v176, %v175
    %v192 = vpack.c.b16 %v178, %v177
    %v193 = vpack.c.b16 %v180, %v179
    %v194 = vpack.c.b16 %v182, %v181
    %v195 = vpack.c.b16 %v184, %v183
    %v196 = vpack.c.b16 %v186, %v185
    %v197 = vpack.c.b16 %v188, %v187
    %v198 = vpack.c.b16 %v190, %v189
    %207 = vmatprep.subr.bf16.mxu0 0
    %208 = vmatpush1.bf16.msra.mxu0 %v191
    %209 = vmatprep.subr.bf16.mxu0 0
    %210 = vmatpush1.bf16.msra.mxu0 %v192
    %211 = vmatprep.subr.bf16.mxu0 0
    %212 = vmatpush1.bf16.msra.mxu0 %v193
    %213 = vmatprep.subr.bf16.mxu0 0
    %214 = vmatpush1.bf16.msra.mxu0 %v194
    %215 = vmatprep.subr.bf16.mxu0 0
    %216 = vmatpush1.bf16.msra.mxu0 %v195
    %217 = vmatprep.subr.bf16.mxu0 0
    %218 = vmatpush1.bf16.msra.mxu0 %v196
    %219 = vmatprep.subr.bf16.mxu0 0
    %220 = vmatpush1.bf16.msra.mxu0 %v197
    %221 = vmatprep.subr.bf16.mxu0 0
    %222 = vmatpush1.bf16.msra.mxu0 %v198
    %223 = vmatprep.subr.bf16.mxu0 0
    %224 = vmatpush1.bf16.msra.mxu0 0
    %225 = vmatprep.subr.bf16.mxu0 0
    %226 = vmatpush1.bf16.msra.mxu0 0
    %227 = vmatprep.subr.bf16.mxu0 0
    %228 = vmatpush1.bf16.msra.mxu0 0
    %229 = vmatprep.subr.bf16.mxu0 0
    %230 = vmatpush1.bf16.msra.mxu0 0
    %231 = vmatprep.subr.bf16.mxu0 0
    %232 = vmatpush1.bf16.msra.mxu0 0
    %233 = vmatprep.subr.bf16.mxu0 0
    %234 = vmatpush1.bf16.msra.mxu0 0
    %235 = vmatprep.subr.bf16.mxu0 0
    %236 = vmatpush1.bf16.msra.mxu0 0
    %237 = vmatprep.subr.bf16.mxu0 0
    %238 = vmatpush1.bf16.msra.mxu0 0
    %239 = vmatprep.mubr.bf16.mxu0 0
    %240 = vmatmul.mubr.bf16.gmra.mrb[0].mxu0 %v151
    %v241 = vpop.f32.mrb[0].mxu0
    %v242 = vadd.f32 %v133, %v241
    %v243 = vpop.f32.mrb[0].mxu0
    %v244 = vpop.f32.mrb[0].mxu0
    %v245 = vadd.f32 %v133, %v244
    %v246 = vpop.f32.mrb[0].mxu0
    %247 = vmatprep.mubr.bf16.mxu0 0
    %248 = vmatmul.mubr.bf16.gmra.mrb[0].mxu0 %v152
    %v249 = vpop.f32.mrb[0].mxu0
    %v250 = vadd.f32 %v133, %v249
    %v251 = vpop.f32.mrb[0].mxu0
    %v252 = vpop.f32.mrb[0].mxu0
    %v253 = vadd.f32 %v133, %v252
    %v254 = vpop.f32.mrb[0].mxu0
    %255 = vmatprep.mubr.bf16.mxu0 0
    %256 = vmatmul.mubr.bf16.gmra.mrb[0].mxu0 %v153
    %v257 = vpop.f32.mrb[0].mxu0
    %v258 = vadd.f32 %v133, %v257
    %v259 = vpop.f32.mrb[0].mxu0
    %v260 = vpop.f32.mrb[0].mxu0
    %v261 = vadd.f32 %v133, %v260
    %v262 = vpop.f32.mrb[0].mxu0
    %263 = vmatprep.mubr.bf16.mxu0 0
    %264 = vmatmul.mubr.bf16.gmra.mrb[0].mxu0 %v154
    %v265 = vpop.f32.mrb[0].mxu0
    %v266 = vadd.f32 %v133, %v265
    %v267 = vpop.f32.mrb[0].mxu0
    %v268 = vpop.f32.mrb[0].mxu0
    %v269 = vadd.f32 %v133, %v268
    %v270 = vpop.f32.mrb[0].mxu0
    %271 = vdwg.mxu0
    %272 = vst [vmem:[#allocation2] sm:$0xff] %v242
    %273 = vst [vmem:[#allocation2 + $0x8] sm:$0xff] %v245
    %274 = vst [vmem:[#allocation2 + $0x10] sm:$0xff] %v250
    %275 = vst [vmem:[#allocation2 + $0x18] sm:$0xff] %v253
    %276 = vst [vmem:[#allocation2 + $0x20] sm:$0xff] %v258
    %277 = vst [vmem:[#allocation2 + $0x28] sm:$0xff] %v261
    %278 = vst [vmem:[#allocation2 + $0x30] sm:$0xff] %v266
    %279 = vst [vmem:[#allocation2 + $0x38] sm:$0xff] %v269
    %v296 = vunpack.c.l.b16 %v104
    %v297 = vunpack.c.l.b16 %v105
    %v298 = vunpack.c.l.b16 %v106
    %v299 = vunpack.c.l.b16 %v107
    %v300 = vunpack.c.l.b16 %v108
    %v301 = vunpack.c.l.b16 %v109
    %v302 = vunpack.c.l.b16 %v110
    %v303 = vunpack.c.l.b16 %v111
    %v304 = vunpack.c.l.b16 %v112
    %v305 = vunpack.c.l.b16 %v113
    %v306 = vunpack.c.l.b16 %v114
    %v307 = vunpack.c.l.b16 %v115
    %v308 = vunpack.c.l.b16 %v116
    %v309 = vunpack.c.l.b16 %v117
    %v310 = vunpack.c.l.b16 %v118
    %v311 = vunpack.c.l.b16 %v119
    %v312 = vpack.c.b16 %v297, %v296
    %v313 = vpack.c.b16 %v299, %v298
    %v314 = vpack.c.b16 %v301, %v300
    %v315 = vpack.c.b16 %v303, %v302
    %v316 = vpack.c.b16 %v305, %v304
    %v317 = vpack.c.b16 %v307, %v306
    %v318 = vpack.c.b16 %v309, %v308
    %v319 = vpack.c.b16 %v311, %v310
    %328 = vmatprep.subr.bf16.mxu0 0
    %329 = vmatpush1.bf16.msra.mxu0 %v312
    %330 = vmatprep.subr.bf16.mxu0 0
    %331 = vmatpush1.bf16.msra.mxu0 %v313
    %332 = vmatprep.subr.bf16.mxu0 0
    %333 = vmatpush1.bf16.msra.mxu0 %v314
    %334 = vmatprep.subr.bf16.mxu0 0
    %335 = vmatpush1.bf16.msra.mxu0 %v315
    %336 = vmatprep.subr.bf16.mxu0 0
    %337 = vmatpush1.bf16.msra.mxu0 %v316
    %338 = vmatprep.subr.bf16.mxu0 0
    %339 = vmatpush1.bf16.msra.mxu0 %v317
    %340 = vmatprep.subr.bf16.mxu0 0
    %341 = vmatpush1.bf16.msra.mxu0 %v318
    %342 = vmatprep.subr.bf16.mxu0 0
    %343 = vmatpush1.bf16.msra.mxu0 %v319
    %344 = vmatprep.subr.bf16.mxu0 0
    %345 = vmatpush1.bf16.msra.mxu0 0
    %346 = vmatprep.subr.bf16.mxu0 0
    %347 = vmatpush1.bf16.msra.mxu0 0
    %348 = vmatprep.subr.bf16.mxu0 0
    %349 = vmatpush1.bf16.msra.mxu0 0
    %350 = vmatprep.subr.bf16.mxu0 0
    %351 = vmatpush1.bf16.msra.mxu0 0
    %352 = vmatprep.subr.bf16.mxu0 0
    %353 = vmatpush1.bf16.msra.mxu0 0
    %354 = vmatprep.subr.bf16.mxu0 0
    %355 = vmatpush1.bf16.msra.mxu0 0
    %356 = vmatprep.subr.bf16.mxu0 0
    %357 = vmatpush1.bf16.msra.mxu0 0
    %358 = vmatprep.subr.bf16.mxu0 0
    %359 = vmatpush1.bf16.msra.mxu0 0
    %360 = vmatprep.mubr.bf16.mxu0 0
    %361 = vmatmul.mubr.bf16.gmra.mrb[0].mxu0 0
    %v362 = vpop.f32.mrb[0].mxu0
    %v363 = vadd.f32 0.0, %v362
    %v364 = vpop.f32.mrb[0].mxu0
    %v365 = vpop.f32.mrb[0].mxu0
    %v366 = vpop.f32.mrb[0].mxu0
    %367 = vdwg.mxu0
    %v368 = vld [vmem:[#allocation2] sm:$0xff]
    %v369 = vadd.f32 %v368, %v363
    %v370 = vtanh.pop %v369
    %371 = vst [vmem:[#allocation2] sm:$0xff] %v370
    %v372 = vpack.c.bf16 %v370, %v370
    %373 = vmatprep.subr.bf16.mxu0 0
    %374 = vmatpush1.bf16.msra.mxu0 %v312
    %375 = vmatprep.subr.bf16.mxu0 0
    %376 = vmatpush1.bf16.msra.mxu0 %v313
    %377 = vmatprep.subr.bf16.mxu0 0
    %378 = vmatpush1.bf16.msra.mxu0 %v314
    %379 = vmatprep.subr.bf16.mxu0 0
    %380 = vmatpush1.bf16.msra.mxu0 %v315
    %381 = vmatprep.subr.bf16.mxu0 0
    %382 = vmatpush1.bf16.msra.mxu0 %v316
    %383 = vmatprep.subr.bf16.mxu0 0
    %384 = vmatpush1.bf16.msra.mxu0 %v317
    %385 = vmatprep.subr.bf16.mxu0 0
    %386 = vmatpush1.bf16.msra.mxu0 %v318
    %387 = vmatprep.subr.bf16.mxu0 0
    %388 = vmatpush1.bf16.msra.mxu0 %v319
    %389 = vmatprep.subr.bf16.mxu0 0
    %390 = vmatpush1.bf16.msra.mxu0 0
    %391 = vmatprep.subr.bf16.mxu0 0
    %392 = vmatpush1.bf16.msra.mxu0 0
    %393 = vmatprep.subr.bf16.mxu0 0
    %394 = vmatpush1.bf16.msra.mxu0 0
    %395 = vmatprep.subr.bf16.mxu0 0
    %396 = vmatpush1.bf16.msra.mxu0 0
    %397 = vmatprep.subr.bf16.mxu0 0
    %398 = vmatpush1.bf16.msra.mxu0 0
    %399 = vmatprep.subr.bf16.mxu0 0
    %400 = vmatpush1.bf16.msra.mxu0 0
    %401 = vmatprep.subr.bf16.mxu0 0
    %402 = vmatpush1.bf16.msra.mxu0 0
    %403 = vmatprep.subr.bf16.mxu0 0
    %404 = vmatpush1.bf16.msra.mxu0 0
    %405 = vmatprep.mubr.bf16.mxu0 0
    %406 = vmatmul.mubr.bf16.gmra.mrb[0].mxu0 %v372
    %v407 = vpop.f32.mrb[0].mxu0
    %v408 = vadd.f32 0.0, %v407
    %v409 = vpop.f32.mrb[0].mxu0
    %v410 = vpop.f32.mrb[0].mxu0
    %v411 = vpop.f32.mrb[0].mxu0
    %412 = vdwg.mxu0
    %s413 = scalar_lea.vmem [#allocation2], 8
    %v414 = vld [vmem:[%s413] sm:$0xff]
    %v415 = vadd.f32 %v414, %v408
    %v416 = vtanh.pop %v415
    %417 = vst [vmem:[%s413] sm:$0xff] %v416
    %v418 = vpack.c.bf16 %v416, %v416
    %419 = vmatprep.subr.bf16.mxu0 0
    %420 = vmatpush1.bf16.msra.mxu0 %v312
    %421 = vmatprep.subr.bf16.mxu0 0
    %422 = vmatpush1.bf16.msra.mxu0 %v313
    %423 = vmatprep.subr.bf16.mxu0 0
    %424 = vmatpush1.bf16.msra.mxu0 %v314
    %425 = vmatprep.subr.bf16.mxu0 0
    %426 = vmatpush1.bf16.msra.mxu0 %v315
    %427 = vmatprep.subr.bf16.mxu0 0
    %428 = vmatpush1.bf16.msra.mxu0 %v316
    %429 = vmatprep.subr.bf16.mxu0 0
    %430 = vmatpush1.bf16.msra.mxu0 %v317
    %431 = vmatprep.subr.bf16.mxu0 0
    %432 = vmatpush1.bf16.msra.mxu0 %v318
    %433 = vmatprep.subr.bf16.mxu0 0
    %434 = vmatpush1.bf16.msra.mxu0 %v319
    %435 = vmatprep.subr.bf16.mxu0 0
    %436 = vmatpush1.bf16.msra.mxu0 0
    %437 = vmatprep.subr.bf16.mxu0 0
    %438 = vmatpush1.bf16.msra.mxu0 0
    %439 = vmatprep.subr.bf16.mxu0 0
    %440 = vmatpush1.bf16.msra.mxu0 0
    %441 = vmatprep.subr.bf16.mxu0 0
    %442 = vmatpush1.bf16.msra.mxu0 0
    %443 = vmatprep.subr.bf16.mxu0 0
    %444 = vmatpush1.bf16.msra.mxu0 0
    %445 = vmatprep.subr.bf16.mxu0 0
    %446 = vmatpush1.bf16.msra.mxu0 0
    %447 = vmatprep.subr.bf16.mxu0 0
    %448 = vmatpush1.bf16.msra.mxu0 0
    %449 = vmatprep.subr.bf16.mxu0 0
    %450 = vmatpush1.bf16.msra.mxu0 0
    %451 = vmatprep.mubr.bf16.mxu0 0
    %452 = vmatmul.mubr.bf16.gmra.mrb[0].mxu0 %v418
    %v453 = vpop.f32.mrb[0].mxu0
    %v454 = vadd.f32 0.0, %v453
    %v455 = vpop.f32.mrb[0].mxu0
    %v456 = vpop.f32.mrb[0].mxu0
    %v457 = vpop.f32.mrb[0].mxu0
    %458 = vdwg.mxu0
    %s459 = scalar_lea.vmem [#allocation2], 16
    %v460 = vld [vmem:[%s459] sm:$0xff]
    %v461 = vadd.f32 %v460, %v454
    %v462 = vtanh.pop %v461
    %463 = vst [vmem:[%s459] sm:$0xff] %v462
    %v464 = vpack.c.bf16 %v462, %v462
    %465 = vmatprep.subr.bf16.mxu0 0
    %466 = vmatpush1.bf16.msra.mxu0 %v312
    %467 = vmatprep.subr.bf16.mxu0 0
    %468 = vmatpush1.bf16.msra.mxu0 %v313
    %469 = vmatprep.subr.bf16.mxu0 0
    %470 = vmatpush1.bf16.msra.mxu0 %v314
    %471 = vmatprep.subr.bf16.mxu0 0
    %472 = vmatpush1.bf16.msra.mxu0 %v315
    %473 = vmatprep.subr.bf16.mxu0 0
    %474 = vmatpush1.bf16.msra.mxu0 %v316
    %475 = vmatprep.subr.bf16.mxu0 0
    %476 = vmatpush1.bf16.msra.mxu0 %v317
    %477 = vmatprep.subr.bf16.mxu0 0
    %478 = vmatpush1.bf16.msra.mxu0 %v318
    %479 = vmatprep.subr.bf16.mxu0 0
    %480 = vmatpush1.bf16.msra.mxu0 %v319
    %481 = vmatprep.subr.bf16.mxu0 0
    %482 = vmatpush1.bf16.msra.mxu0 0
    %483 = vmatprep.subr.bf16.mxu0 0
    %484 = vmatpush1.bf16.msra.mxu0 0
    %485 = vmatprep.subr.bf16.mxu0 0
    %486 = vmatpush1.bf16.msra.mxu0 0
    %487 = vmatprep.subr.bf16.mxu0 0
    %488 = vmatpush1.bf16.msra.mxu0 0
    %489 = vmatprep.subr.bf16.mxu0 0
    %490 = vmatpush1.bf16.msra.mxu0 0
    %491 = vmatprep.subr.bf16.mxu0 0
    %492 = vmatpush1.bf16.msra.mxu0 0
    %493 = vmatprep.subr.bf16.mxu0 0
    %494 = vmatpush1.bf16.msra.mxu0 0
    %495 = vmatprep.subr.bf16.mxu0 0
    %496 = vmatpush1.bf16.msra.mxu0 0
    %497 = vmatprep.mubr.bf16.mxu0 0
    %498 = vmatmul.mubr.bf16.gmra.mrb[0].mxu0 %v464
    %v499 = vpop.f32.mrb[0].mxu0
    %v500 = vadd.f32 0.0, %v499
    %v501 = vpop.f32.mrb[0].mxu0
    %v502 = vpop.f32.mrb[0].mxu0
    %v503 = vpop.f32.mrb[0].mxu0
    %504 = vdwg.mxu0
    %s505 = scalar_lea.vmem [#allocation2], 24
    %v506 = vld [vmem:[%s505] sm:$0xff]
    %v507 = vadd.f32 %v506, %v500
    %v508 = vtanh.pop %v507
    %509 = vst [vmem:[%s505] sm:$0xff] %v508
    %v510 = vpack.c.bf16 %v508, %v508
    %511 = vmatprep.subr.bf16.mxu0 0
    %512 = vmatpush1.bf16.msra.mxu0 %v312
    %513 = vmatprep.subr.bf16.mxu0 0
    %514 = vmatpush1.bf16.msra.mxu0 %v313
    %515 = vmatprep.subr.bf16.mxu0 0
    %516 = vmatpush1.bf16.msra.mxu0 %v314
    %517 = vmatprep.subr.bf16.mxu0 0
    %518 = vmatpush1.bf16.msra.mxu0 %v315
    %519 = vmatprep.subr.bf16.mxu0 0
    %520 = vmatpush1.bf16.msra.mxu0 %v316
    %521 = vmatprep.subr.bf16.mxu0 0
    %522 = vmatpush1.bf16.msra.mxu0 %v317
    %523 = vmatprep.subr.bf16.mxu0 0
    %524 = vmatpush1.bf16.msra.mxu0 %v318
    %525 = vmatprep.subr.bf16.mxu0 0
    %526 = vmatpush1.bf16.msra.mxu0 %v319
    %527 = vmatprep.subr.bf16.mxu0 0
    %528 = vmatpush1.bf16.msra.mxu0 0
    %529 = vmatprep.subr.bf16.mxu0 0
    %530 = vmatpush1.bf16.msra.mxu0 0
    %531 = vmatprep.subr.bf16.mxu0 0
    %532 = vmatpush1.bf16.msra.mxu0 0
    %533 = vmatprep.subr.bf16.mxu0 0
    %534 = vmatpush1.bf16.msra.mxu0 0
    %535 = vmatprep.subr.bf16.mxu0 0
    %536 = vmatpush1.bf16.msra.mxu0 0
    %537 = vmatprep.subr.bf16.mxu0 0
    %538 = vmatpush1.bf16.msra.mxu0 0
    %539 = vmatprep.subr.bf16.mxu0 0
    %540 = vmatpush1.bf16.msra.mxu0 0
    %541 = vmatprep.subr.bf16.mxu0 0
    %542 = vmatpush1.bf16.msra.mxu0 0
    %543 = vmatprep.mubr.bf16.mxu0 0
    %544 = vmatmul.mubr.bf16.gmra.mrb[0].mxu0 %v510
    %v545 = vpop.f32.mrb[0].mxu0
    %v546 = vadd.f32 0.0, %v545
    %v547 = vpop.f32.mrb[0].mxu0
    %v548 = vpop.f32.mrb[0].mxu0
    %v549 = vpop.f32.mrb[0].mxu0
    %550 = vdwg.mxu0
    %s551 = scalar_lea.vmem [#allocation2], 32
    %v552 = vld [vmem:[%s551] sm:$0xff]
    %v553 = vadd.f32 %v552, %v546
    %v554 = vtanh.pop %v553
    %555 = vst [vmem:[%s551] sm:$0xff] %v554
    %v556 = vpack.c.bf16 %v554, %v554
    %557 = vmatprep.subr.bf16.mxu0 0
    %558 = vmatpush1.bf16.msra.mxu0 %v312
    %559 = vmatprep.subr.bf16.mxu0 0
    %560 = vmatpush1.bf16.msra.mxu0 %v313
    %561 = vmatprep.subr.bf16.mxu0 0
    %562 = vmatpush1.bf16.msra.mxu0 %v314
    %563 = vmatprep.subr.bf16.mxu0 0
    %564 = vmatpush1.bf16.msra.mxu0 %v315
    %565 = vmatprep.subr.bf16.mxu0 0
    %566 = vmatpush1.bf16.msra.mxu0 %v316
    %567 = vmatprep.subr.bf16.mxu0 0
    %568 = vmatpush1.bf16.msra.mxu0 %v317
    %569 = vmatprep.subr.bf16.mxu0 0
    %570 = vmatpush1.bf16.msra.mxu0 %v318
    %571 = vmatprep.subr.bf16.mxu0 0
    %572 = vmatpush1.bf16.msra.mxu0 %v319
    %573 = vmatprep.subr.bf16.mxu0 0
    %574 = vmatpush1.bf16.msra.mxu0 0
    %575 = vmatprep.subr.bf16.mxu0 0
    %576 = vmatpush1.bf16.msra.mxu0 0
    %577 = vmatprep.subr.bf16.mxu0 0
    %578 = vmatpush1.bf16.msra.mxu0 0
    %579 = vmatprep.subr.bf16.mxu0 0
    %580 = vmatpush1.bf16.msra.mxu0 0
    %581 = vmatprep.subr.bf16.mxu0 0
    %582 = vmatpush1.bf16.msra.mxu0 0
    %583 = vmatprep.subr.bf16.mxu0 0
    %584 = vmatpush1.bf16.msra.mxu0 0
    %585 = vmatprep.subr.bf16.mxu0 0
    %586 = vmatpush1.bf16.msra.mxu0 0
    %587 = vmatprep.subr.bf16.mxu0 0
    %588 = vmatpush1.bf16.msra.mxu0 0
    %589 = vmatprep.mubr.bf16.mxu0 0
    %590 = vmatmul.mubr.bf16.gmra.mrb[0].mxu0 %v556
    %v591 = vpop.f32.mrb[0].mxu0
    %v592 = vadd.f32 0.0, %v591
    %v593 = vpop.f32.mrb[0].mxu0
    %v594 = vpop.f32.mrb[0].mxu0
    %v595 = vpop.f32.mrb[0].mxu0
    %596 = vdwg.mxu0
    %s597 = scalar_lea.vmem [#allocation2], 40
    %v598 = vld [vmem:[%s597] sm:$0xff]
    %v599 = vadd.f32 %v598, %v592
    %v600 = vtanh.pop %v599
    %601 = vst [vmem:[%s597] sm:$0xff] %v600
    %v602 = vpack.c.bf16 %v600, %v600
    %603 = vmatprep.subr.bf16.mxu0 0
    %604 = vmatpush1.bf16.msra.mxu0 %v312
    %605 = vmatprep.subr.bf16.mxu0 0
    %606 = vmatpush1.bf16.msra.mxu0 %v313
    %607 = vmatprep.subr.bf16.mxu0 0
    %608 = vmatpush1.bf16.msra.mxu0 %v314
    %609 = vmatprep.subr.bf16.mxu0 0
    %610 = vmatpush1.bf16.msra.mxu0 %v315
    %611 = vmatprep.subr.bf16.mxu0 0
    %612 = vmatpush1.bf16.msra.mxu0 %v316
    %613 = vmatprep.subr.bf16.mxu0 0
    %614 = vmatpush1.bf16.msra.mxu0 %v317
    %615 = vmatprep.subr.bf16.mxu0 0
    %616 = vmatpush1.bf16.msra.mxu0 %v318
    %617 = vmatprep.subr.bf16.mxu0 0
    %618 = vmatpush1.bf16.msra.mxu0 %v319
    %619 = vmatprep.subr.bf16.mxu0 0
    %620 = vmatpush1.bf16.msra.mxu0 0
    %621 = vmatprep.subr.bf16.mxu0 0
    %622 = vmatpush1.bf16.msra.mxu0 0
    %623 = vmatprep.subr.bf16.mxu0 0
    %624 = vmatpush1.bf16.msra.mxu0 0
    %625 = vmatprep.subr.bf16.mxu0 0
    %626 = vmatpush1.bf16.msra.mxu0 0
    %627 = vmatprep.subr.bf16.mxu0 0
    %628 = vmatpush1.bf16.msra.mxu0 0
    %629 = vmatprep.subr.bf16.mxu0 0
    %630 = vmatpush1.bf16.msra.mxu0 0
    %631 = vmatprep.subr.bf16.mxu0 0
    %632 = vmatpush1.bf16.msra.mxu0 0
    %633 = vmatprep.subr.bf16.mxu0 0
    %634 = vmatpush1.bf16.msra.mxu0 0
    %635 = vmatprep.mubr.bf16.mxu0 0
    %636 = vmatmul.mubr.bf16.gmra.mrb[0].mxu0 %v602
    %v637 = vpop.f32.mrb[0].mxu0
    %v638 = vadd.f32 0.0, %v637
    %v639 = vpop.f32.mrb[0].mxu0
    %v640 = vpop.f32.mrb[0].mxu0
    %v641 = vpop.f32.mrb[0].mxu0
    %642 = vdwg.mxu0
    %s643 = scalar_lea.vmem [#allocation2], 48
    %v644 = vld [vmem:[%s643] sm:$0xff]
    %v645 = vadd.f32 %v644, %v638
    %v646 = vtanh.pop %v645
    %647 = vst [vmem:[%s643] sm:$0xff] %v646
    %v648 = vpack.c.bf16 %v646, %v646
    %649 = vmatprep.subr.bf16.mxu0 0
    %650 = vmatpush1.bf16.msra.mxu0 %v312
    %651 = vmatprep.subr.bf16.mxu0 0
    %652 = vmatpush1.bf16.msra.mxu0 %v313
    %653 = vmatprep.subr.bf16.mxu0 0
    %654 = vmatpush1.bf16.msra.mxu0 %v314
    %655 = vmatprep.subr.bf16.mxu0 0
    %656 = vmatpush1.bf16.msra.mxu0 %v315
    %657 = vmatprep.subr.bf16.mxu0 0
    %658 = vmatpush1.bf16.msra.mxu0 %v316
    %659 = vmatprep.subr.bf16.mxu0 0
    %660 = vmatpush1.bf16.msra.mxu0 %v317
    %661 = vmatprep.subr.bf16.mxu0 0
    %662 = vmatpush1.bf16.msra.mxu0 %v318
    %663 = vmatprep.subr.bf16.mxu0 0
    %664 = vmatpush1.bf16.msra.mxu0 %v319
    %665 = vmatprep.subr.bf16.mxu0 0
    %666 = vmatpush1.bf16.msra.mxu0 0
    %667 = vmatprep.subr.bf16.mxu0 0
    %668 = vmatpush1.bf16.msra.mxu0 0
    %669 = vmatprep.subr.bf16.mxu0 0
    %670 = vmatpush1.bf16.msra.mxu0 0
    %671 = vmatprep.subr.bf16.mxu0 0
    %672 = vmatpush1.bf16.msra.mxu0 0
    %673 = vmatprep.subr.bf16.mxu0 0
    %674 = vmatpush1.bf16.msra.mxu0 0
    %675 = vmatprep.subr.bf16.mxu0 0
    %676 = vmatpush1.bf16.msra.mxu0 0
    %677 = vmatprep.subr.bf16.mxu0 0
    %678 = vmatpush1.bf16.msra.mxu0 0
    %679 = vmatprep.subr.bf16.mxu0 0
    %680 = vmatpush1.bf16.msra.mxu0 0
    %681 = vmatprep.mubr.bf16.mxu0 0
    %682 = vmatmul.mubr.bf16.gmra.mrb[0].mxu0 %v648
    %v683 = vpop.f32.mrb[0].mxu0
    %v684 = vadd.f32 0.0, %v683
    %v685 = vpop.f32.mrb[0].mxu0
    %v686 = vpop.f32.mrb[0].mxu0
    %v687 = vpop.f32.mrb[0].mxu0
    %688 = vdwg.mxu0
    %s689 = scalar_lea.vmem [#allocation2], 56
    %v690 = vld [vmem:[%s689] sm:$0xff]
    %v691 = vadd.f32 %v690, %v684
    %v692 = vtanh.pop %v691
    %693 = vst [vmem:[%s689] sm:$0xff] %v692
    %v694 = vld [vmem:[#allocation6] sm:$0xf]
    %v695 = vld [vmem:[#allocation6 + $0x4] sm:$0xf]
    %v696 = vld [vmem:[#allocation6 + $0x8] sm:$0xf]
    %v697 = vld [vmem:[#allocation6 + $0xc] sm:$0xf]
    %v698 = vld [vmem:[#allocation6 + $0x10] sm:$0xf]
    %v699 = vld [vmem:[#allocation6 + $0x14] sm:$0xf]
    %v700 = vld [vmem:[#allocation6 + $0x18] sm:$0xf]
    %v701 = vld [vmem:[#allocation6 + $0x1c] sm:$0xf]
    %v702 = vld [vmem:[#allocation6 + $0x20] sm:$0xf]
    %v703 = vld [vmem:[#allocation6 + $0x24] sm:$0xf]
    %v704 = vld [vmem:[#allocation6 + $0x28] sm:$0xf]
    %v705 = vld [vmem:[#allocation6 + $0x2c] sm:$0xf]
    %v706 = vld [vmem:[#allocation6 + $0x30] sm:$0xf]
    %v707 = vld [vmem:[#allocation6 + $0x34] sm:$0xf]
    %v708 = vld [vmem:[#allocation6 + $0x38] sm:$0xf]
    %v709 = vld [vmem:[#allocation6 + $0x3c] sm:$0xf]
    %v710 = vld [vmem:[#allocation8] sm:$0xf]
    %v711 = vld [vmem:[#allocation8 + $0x4] sm:$0xf]
    %v712 = vld [vmem:[#allocation8 + $0x8] sm:$0xf]
    %v713 = vld [vmem:[#allocation8 + $0xc] sm:$0xf]
    %v714 = vld [vmem:[#allocation8 + $0x10] sm:$0xf]
    %v715 = vld [vmem:[#allocation8 + $0x14] sm:$0xf]
    %v716 = vld [vmem:[#allocation8 + $0x18] sm:$0xf]
    %v717 = vld [vmem:[#allocation8 + $0x1c] sm:$0xf]
    %v718 = vld [vmem:[#allocation8 + $0x20] sm:$0xf]
    %v719 = vld [vmem:[#allocation8 + $0x24] sm:$0xf]
    %v720 = vld [vmem:[#allocation8 + $0x28] sm:$0xf]
    %v721 = vld [vmem:[#allocation8 + $0x2c] sm:$0xf]
    %v722 = vld [vmem:[#allocation8 + $0x30] sm:$0xf]
    %v723 = vld [vmem:[#allocation8 + $0x34] sm:$0xf]
    %v724 = vld [vmem:[#allocation8 + $0x38] sm:$0xf]
    %v725 = vld [vmem:[#allocation8 + $0x3c] sm:$0xf]
    %v726 = vld [vmem:[%s6] sm:$0x1]
    %v727 = vld [vmem:[#allocation2] sm:$0xff]
    %v728 = vld [vmem:[#allocation2 + $0x8] sm:$0xff]
    %v729 = vld [vmem:[#allocation2 + $0x10] sm:$0xff]
    %v730 = vld [vmem:[#allocation2 + $0x18] sm:$0xff]
    %v731 = vld [vmem:[#allocation2 + $0x20] sm:$0xff]
    %v732 = vld [vmem:[#allocation2 + $0x28] sm:$0xff]
    %v733 = vld [vmem:[#allocation2 + $0x30] sm:$0xff]
    %v734 = vld [vmem:[#allocation2 + $0x38] sm:$0xff]
    %v735 = vpack.c.bf16 %v728, %v727
    %v736 = vpack.c.bf16 %v730, %v729
    %v737 = vpack.c.bf16 %v732, %v731
    %v738 = vpack.c.bf16 %v734, %v733
    %v740 = vlaneseq
    %v741 = vshrl.u32 %v740, 7
    %v742 = vsub.s32 0, %v741
    %v743 = vrot.slane %v726, %v742
    %v761 = vunpack.c.l.b16 %v694
    %v762 = vunpack.c.l.b16 %v695
    %v763 = vunpack.c.l.b16 %v696
    %v764 = vunpack.c.l.b16 %v697
    %v765 = vunpack.c.l.b16 %v698
    %v766 = vunpack.c.l.b16 %v699
    %v767 = vunpack.c.l.b16 %v700
    %v768 = vunpack.c.l.b16 %v701
    %v769 = vunpack.c.l.b16 %v702
    %v770 = vunpack.c.l.b16 %v703
    %v771 = vunpack.c.l.b16 %v704
    %v772 = vunpack.c.l.b16 %v705
    %v773 = vunpack.c.l.b16 %v706
    %v774 = vunpack.c.l.b16 %v707
    %v775 = vunpack.c.l.b16 %v708
    %v776 = vunpack.c.l.b16 %v709
    %v777 = vpack.c.b16 %v762, %v761
    %v778 = vpack.c.b16 %v764, %v763
    %v779 = vpack.c.b16 %v766, %v765
    %v780 = vpack.c.b16 %v768, %v767
    %v781 = vpack.c.b16 %v770, %v769
    %v782 = vpack.c.b16 %v772, %v771
    %v783 = vpack.c.b16 %v774, %v773
    %v784 = vpack.c.b16 %v776, %v775
    %793 = vmatprep.subr.bf16.mxu0 0
    %794 = vmatpush1.bf16.msra.mxu0 %v777
    %795 = vmatprep.subr.bf16.mxu0 0
    %796 = vmatpush1.bf16.msra.mxu0 %v778
    %797 = vmatprep.subr.bf16.mxu0 0
    %798 = vmatpush1.bf16.msra.mxu0 %v779
    %799 = vmatprep.subr.bf16.mxu0 0
    %800 = vmatpush1.bf16.msra.mxu0 %v780
    %801 = vmatprep.subr.bf16.mxu0 0
    %802 = vmatpush1.bf16.msra.mxu0 %v781
    %803 = vmatprep.subr.bf16.mxu0 0
    %804 = vmatpush1.bf16.msra.mxu0 %v782
    %805 = vmatprep.subr.bf16.mxu0 0
    %806 = vmatpush1.bf16.msra.mxu0 %v783
    %807 = vmatprep.subr.bf16.mxu0 0
    %808 = vmatpush1.bf16.msra.mxu0 %v784
    %809 = vmatprep.subr.bf16.mxu0 0
    %810 = vmatpush1.bf16.msra.mxu0 0
    %811 = vmatprep.subr.bf16.mxu0 0
    %812 = vmatpush1.bf16.msra.mxu0 0
    %813 = vmatprep.subr.bf16.mxu0 0
    %814 = vmatpush1.bf16.msra.mxu0 0
    %815 = vmatprep.subr.bf16.mxu0 0
    %816 = vmatpush1.bf16.msra.mxu0 0
    %817 = vmatprep.subr.bf16.mxu0 0
    %818 = vmatpush1.bf16.msra.mxu0 0
    %819 = vmatprep.subr.bf16.mxu0 0
    %820 = vmatpush1.bf16.msra.mxu0 0
    %821 = vmatprep.subr.bf16.mxu0 0
    %822 = vmatpush1.bf16.msra.mxu0 0
    %823 = vmatprep.subr.bf16.mxu0 0
    %824 = vmatpush1.bf16.msra.mxu0 0
    %825 = vmatprep.mubr.bf16.mxu0 0
    %826 = vmatmul.mubr.bf16.gmra.mrb[0].mxu0 %v735
    %v827 = vpop.f32.mrb[0].mxu0
    %v828 = vadd.f32 %v743, %v827
    %v829 = vpop.f32.mrb[0].mxu0
    %v830 = vpop.f32.mrb[0].mxu0
    %v831 = vadd.f32 %v743, %v830
    %v832 = vpop.f32.mrb[0].mxu0
    %833 = vmatprep.mubr.bf16.mxu0 0
    %834 = vmatmul.mubr.bf16.gmra.mrb[0].mxu0 %v736
    %v835 = vpop.f32.mrb[0].mxu0
    %v836 = vadd.f32 %v743, %v835
    %v837 = vpop.f32.mrb[0].mxu0
    %v838 = vpop.f32.mrb[0].mxu0
    %v839 = vadd.f32 %v743, %v838
    %v840 = vpop.f32.mrb[0].mxu0
    %841 = vmatprep.mubr.bf16.mxu0 0
    %842 = vmatmul.mubr.bf16.gmra.mrb[0].mxu0 %v737
    %v843 = vpop.f32.mrb[0].mxu0
    %v844 = vadd.f32 %v743, %v843
    %v845 = vpop.f32.mrb[0].mxu0
    %v846 = vpop.f32.mrb[0].mxu0
    %v847 = vadd.f32 %v743, %v846
    %v848 = vpop.f32.mrb[0].mxu0
    %849 = vmatprep.mubr.bf16.mxu0 0
    %850 = vmatmul.mubr.bf16.gmra.mrb[0].mxu0 %v738
    %v851 = vpop.f32.mrb[0].mxu0
    %v852 = vadd.f32 %v743, %v851
    %v853 = vpop.f32.mrb[0].mxu0
    %v854 = vpop.f32.mrb[0].mxu0
    %v855 = vadd.f32 %v743, %v854
    %v856 = vpop.f32.mrb[0].mxu0
    %857 = vdwg.mxu0
    %858 = vst [vmem:[#allocation3] sm:$0xff] %v828
    %859 = vst [vmem:[#allocation3 + $0x8] sm:$0xff] %v831
    %860 = vst [vmem:[#allocation3 + $0x10] sm:$0xff] %v836
    %861 = vst [vmem:[#allocation3 + $0x18] sm:$0xff] %v839
    %862 = vst [vmem:[#allocation3 + $0x20] sm:$0xff] %v844
    %863 = vst [vmem:[#allocation3 + $0x28] sm:$0xff] %v847
    %864 = vst [vmem:[#allocation3 + $0x30] sm:$0xff] %v852
    %865 = vst [vmem:[#allocation3 + $0x38] sm:$0xff] %v855
    %v882 = vunpack.c.l.b16 %v710
    %v883 = vunpack.c.l.b16 %v711
    %v884 = vunpack.c.l.b16 %v712
    %v885 = vunpack.c.l.b16 %v713
    %v886 = vunpack.c.l.b16 %v714
    %v887 = vunpack.c.l.b16 %v715
    %v888 = vunpack.c.l.b16 %v716
    %v889 = vunpack.c.l.b16 %v717
    %v890 = vunpack.c.l.b16 %v718
    %v891 = vunpack.c.l.b16 %v719
    %v892 = vunpack.c.l.b16 %v720
    %v893 = vunpack.c.l.b16 %v721
    %v894 = vunpack.c.l.b16 %v722
    %v895 = vunpack.c.l.b16 %v723
    %v896 = vunpack.c.l.b16 %v724
    %v897 = vunpack.c.l.b16 %v725
    %v898 = vpack.c.b16 %v883, %v882
    %v899 = vpack.c.b16 %v885, %v884
    %v900 = vpack.c.b16 %v887, %v886
    %v901 = vpack.c.b16 %v889, %v888
    %v902 = vpack.c.b16 %v891, %v890
    %v903 = vpack.c.b16 %v893, %v892
    %v904 = vpack.c.b16 %v895, %v894
    %v905 = vpack.c.b16 %v897, %v896
    %914 = vmatprep.subr.bf16.mxu0 0
    %915 = vmatpush1.bf16.msra.mxu0 %v898
    %916 = vmatprep.subr.bf16.mxu0 0
    %917 = vmatpush1.bf16.msra.mxu0 %v899
    %918 = vmatprep.subr.bf16.mxu0 0
    %919 = vmatpush1.bf16.msra.mxu0 %v900
    %920 = vmatprep.subr.bf16.mxu0 0
    %921 = vmatpush1.bf16.msra.mxu0 %v901
    %922 = vmatprep.subr.bf16.mxu0 0
    %923 = vmatpush1.bf16.msra.mxu0 %v902
    %924 = vmatprep.subr.bf16.mxu0 0
    %925 = vmatpush1.bf16.msra.mxu0 %v903
    %926 = vmatprep.subr.bf16.mxu0 0
    %927 = vmatpush1.bf16.msra.mxu0 %v904
    %928 = vmatprep.subr.bf16.mxu0 0
    %929 = vmatpush1.bf16.msra.mxu0 %v905
    %930 = vmatprep.subr.bf16.mxu0 0
    %931 = vmatpush1.bf16.msra.mxu0 0
    %932 = vmatprep.subr.bf16.mxu0 0
    %933 = vmatpush1.bf16.msra.mxu0 0
    %934 = vmatprep.subr.bf16.mxu0 0
    %935 = vmatpush1.bf16.msra.mxu0 0
    %936 = vmatprep.subr.bf16.mxu0 0
    %937 = vmatpush1.bf16.msra.mxu0 0
    %938 = vmatprep.subr.bf16.mxu0 0
    %939 = vmatpush1.bf16.msra.mxu0 0
    %940 = vmatprep.subr.bf16.mxu0 0
    %941 = vmatpush1.bf16.msra.mxu0 0
    %942 = vmatprep.subr.bf16.mxu0 0
    %943 = vmatpush1.bf16.msra.mxu0 0
    %944 = vmatprep.subr.bf16.mxu0 0
    %945 = vmatpush1.bf16.msra.mxu0 0
    %946 = vmatprep.mubr.bf16.mxu0 0
    %947 = vmatmul.mubr.bf16.gmra.mrb[0].mxu0 0
    %v948 = vpop.f32.mrb[0].mxu0
    %v949 = vadd.f32 0.0, %v948
    %v950 = vpop.f32.mrb[0].mxu0
    %v951 = vpop.f32.mrb[0].mxu0
    %v952 = vpop.f32.mrb[0].mxu0
    %953 = vdwg.mxu0
    %v954 = vld [vmem:[#allocation3] sm:$0xff]
    %v955 = vadd.f32 %v954, %v949
    %v956 = vtanh.pop %v955
    %957 = vst [vmem:[#allocation3] sm:$0xff] %v956
    %v958 = vpack.c.bf16 %v956, %v956
    %959 = vmatprep.subr.bf16.mxu0 0
    %960 = vmatpush1.bf16.msra.mxu0 %v898
    %961 = vmatprep.subr.bf16.mxu0 0
    %962 = vmatpush1.bf16.msra.mxu0 %v899
    %963 = vmatprep.subr.bf16.mxu0 0
    %964 = vmatpush1.bf16.msra.mxu0 %v900
    %965 = vmatprep.subr.bf16.mxu0 0
    %966 = vmatpush1.bf16.msra.mxu0 %v901
    %967 = vmatprep.subr.bf16.mxu0 0
    %968 = vmatpush1.bf16.msra.mxu0 %v902
    %969 = vmatprep.subr.bf16.mxu0 0
    %970 = vmatpush1.bf16.msra.mxu0 %v903
    %971 = vmatprep.subr.bf16.mxu0 0
    %972 = vmatpush1.bf16.msra.mxu0 %v904
    %973 = vmatprep.subr.bf16.mxu0 0
    %974 = vmatpush1.bf16.msra.mxu0 %v905
    %975 = vmatprep.subr.bf16.mxu0 0
    %976 = vmatpush1.bf16.msra.mxu0 0
    %977 = vmatprep.subr.bf16.mxu0 0
    %978 = vmatpush1.bf16.msra.mxu0 0
    %979 = vmatprep.subr.bf16.mxu0 0
    %980 = vmatpush1.bf16.msra.mxu0 0
    %981 = vmatprep.subr.bf16.mxu0 0
    %982 = vmatpush1.bf16.msra.mxu0 0
    %983 = vmatprep.subr.bf16.mxu0 0
    %984 = vmatpush1.bf16.msra.mxu0 0
    %985 = vmatprep.subr.bf16.mxu0 0
    %986 = vmatpush1.bf16.msra.mxu0 0
    %987 = vmatprep.subr.bf16.mxu0 0
    %988 = vmatpush1.bf16.msra.mxu0 0
    %989 = vmatprep.subr.bf16.mxu0 0
    %990 = vmatpush1.bf16.msra.mxu0 0
    %991 = vmatprep.mubr.bf16.mxu0 0
    %992 = vmatmul.mubr.bf16.gmra.mrb[0].mxu0 %v958
    %v993 = vpop.f32.mrb[0].mxu0
    %v994 = vadd.f32 0.0, %v993
    %v995 = vpop.f32.mrb[0].mxu0
    %v996 = vpop.f32.mrb[0].mxu0
    %v997 = vpop.f32.mrb[0].mxu0
    %998 = vdwg.mxu0
    %s999 = scalar_lea.vmem [#allocation3], 8
    %v1000 = vld [vmem:[%s999] sm:$0xff]
    %v1001 = vadd.f32 %v1000, %v994
    %v1002 = vtanh.pop %v1001
    %1003 = vst [vmem:[%s999] sm:$0xff] %v1002
    %v1004 = vpack.c.bf16 %v1002, %v1002
    %1005 = vmatprep.subr.bf16.mxu0 0
    %1006 = vmatpush1.bf16.msra.mxu0 %v898
    %1007 = vmatprep.subr.bf16.mxu0 0
    %1008 = vmatpush1.bf16.msra.mxu0 %v899
    %1009 = vmatprep.subr.bf16.mxu0 0
    %1010 = vmatpush1.bf16.msra.mxu0 %v900
    %1011 = vmatprep.subr.bf16.mxu0 0
    %1012 = vmatpush1.bf16.msra.mxu0 %v901
    %1013 = vmatprep.subr.bf16.mxu0 0
    %1014 = vmatpush1.bf16.msra.mxu0 %v902
    %1015 = vmatprep.subr.bf16.mxu0 0
    %1016 = vmatpush1.bf16.msra.mxu0 %v903
    %1017 = vmatprep.subr.bf16.mxu0 0
    %1018 = vmatpush1.bf16.msra.mxu0 %v904
    %1019 = vmatprep.subr.bf16.mxu0 0
    %1020 = vmatpush1.bf16.msra.mxu0 %v905
    %1021 = vmatprep.subr.bf16.mxu0 0
    %1022 = vmatpush1.bf16.msra.mxu0 0
    %1023 = vmatprep.subr.bf16.mxu0 0
    %1024 = vmatpush1.bf16.msra.mxu0 0
    %1025 = vmatprep.subr.bf16.mxu0 0
    %1026 = vmatpush1.bf16.msra.mxu0 0
    %1027 = vmatprep.subr.bf16.mxu0 0
    %1028 = vmatpush1.bf16.msra.mxu0 0
    %1029 = vmatprep.subr.bf16.mxu0 0
    %1030 = vmatpush1.bf16.msra.mxu0 0
    %1031 = vmatprep.subr.bf16.mxu0 0
    %1032 = vmatpush1.bf16.msra.mxu0 0
    %1033 = vmatprep.subr.bf16.mxu0 0
    %1034 = vmatpush1.bf16.msra.mxu0 0
    %1035 = vmatprep.subr.bf16.mxu0 0
    %1036 = vmatpush1.bf16.msra.mxu0 0
    %1037 = vmatprep.mubr.bf16.mxu0 0
    %1038 = vmatmul.mubr.bf16.gmra.mrb[0].mxu0 %v1004
    %v1039 = vpop.f32.mrb[0].mxu0
    %v1040 = vadd.f32 0.0, %v1039
    %v1041 = vpop.f32.mrb[0].mxu0
    %v1042 = vpop.f32.mrb[0].mxu0
    %v1043 = vpop.f32.mrb[0].mxu0
    %1044 = vdwg.mxu0
    %s1045 = scalar_lea.vmem [#allocation3], 16
    %v1046 = vld [vmem:[%s1045] sm:$0xff]
    %v1047 = vadd.f32 %v1046, %v1040
    %v1048 = vtanh.pop %v1047
    %1049 = vst [vmem:[%s1045] sm:$0xff] %v1048
    %v1050 = vpack.c.bf16 %v1048, %v1048
    %1051 = vmatprep.subr.bf16.mxu0 0
    %1052 = vmatpush1.bf16.msra.mxu0 %v898
    %1053 = vmatprep.subr.bf16.mxu0 0
    %1054 = vmatpush1.bf16.msra.mxu0 %v899
    %1055 = vmatprep.subr.bf16.mxu0 0
    %1056 = vmatpush1.bf16.msra.mxu0 %v900
    %1057 = vmatprep.subr.bf16.mxu0 0
    %1058 = vmatpush1.bf16.msra.mxu0 %v901
    %1059 = vmatprep.subr.bf16.mxu0 0
    %1060 = vmatpush1.bf16.msra.mxu0 %v902
    %1061 = vmatprep.subr.bf16.mxu0 0
    %1062 = vmatpush1.bf16.msra.mxu0 %v903
    %1063 = vmatprep.subr.bf16.mxu0 0
    %1064 = vmatpush1.bf16.msra.mxu0 %v904
    %1065 = vmatprep.subr.bf16.mxu0 0
    %1066 = vmatpush1.bf16.msra.mxu0 %v905
    %1067 = vmatprep.subr.bf16.mxu0 0
    %1068 = vmatpush1.bf16.msra.mxu0 0
    %1069 = vmatprep.subr.bf16.mxu0 0
    %1070 = vmatpush1.bf16.msra.mxu0 0
    %1071 = vmatprep.subr.bf16.mxu0 0
    %1072 = vmatpush1.bf16.msra.mxu0 0
    %1073 = vmatprep.subr.bf16.mxu0 0
    %1074 = vmatpush1.bf16.msra.mxu0 0
    %1075 = vmatprep.subr.bf16.mxu0 0
    %1076 = vmatpush1.bf16.msra.mxu0 0
    %1077 = vmatprep.subr.bf16.mxu0 0
    %1078 = vmatpush1.bf16.msra.mxu0 0
    %1079 = vmatprep.subr.bf16.mxu0 0
    %1080 = vmatpush1.bf16.msra.mxu0 0
    %1081 = vmatprep.subr.bf16.mxu0 0
    %1082 = vmatpush1.bf16.msra.mxu0 0
    %1083 = vmatprep.mubr.bf16.mxu0 0
    %1084 = vmatmul.mubr.bf16.gmra.mrb[0].mxu0 %v1050
    %v1085 = vpop.f32.mrb[0].mxu0
    %v1086 = vadd.f32 0.0, %v1085
    %v1087 = vpop.f32.mrb[0].mxu0
    %v1088 = vpop.f32.mrb[0].mxu0
    %v1089 = vpop.f32.mrb[0].mxu0
    %1090 = vdwg.mxu0
    %s1091 = scalar_lea.vmem [#allocation3], 24
    %v1092 = vld [vmem:[%s1091] sm:$0xff]
    %v1093 = vadd.f32 %v1092, %v1086
    %v1094 = vtanh.pop %v1093
    %1095 = vst [vmem:[%s1091] sm:$0xff] %v1094
    %v1096 = vpack.c.bf16 %v1094, %v1094
    %1097 = vmatprep.subr.bf16.mxu0 0
    %1098 = vmatpush1.bf16.msra.mxu0 %v898
    %1099 = vmatprep.subr.bf16.mxu0 0
    %1100 = vmatpush1.bf16.msra.mxu0 %v899
    %1101 = vmatprep.subr.bf16.mxu0 0
    %1102 = vmatpush1.bf16.msra.mxu0 %v900
    %1103 = vmatprep.subr.bf16.mxu0 0
    %1104 = vmatpush1.bf16.msra.mxu0 %v901
    %1105 = vmatprep.subr.bf16.mxu0 0
    %1106 = vmatpush1.bf16.msra.mxu0 %v902
    %1107 = vmatprep.subr.bf16.mxu0 0
    %1108 = vmatpush1.bf16.msra.mxu0 %v903
    %1109 = vmatprep.subr.bf16.mxu0 0
    %1110 = vmatpush1.bf16.msra.mxu0 %v904
    %1111 = vmatprep.subr.bf16.mxu0 0
    %1112 = vmatpush1.bf16.msra.mxu0 %v905
    %1113 = vmatprep.subr.bf16.mxu0 0
    %1114 = vmatpush1.bf16.msra.mxu0 0
    %1115 = vmatprep.subr.bf16.mxu0 0
    %1116 = vmatpush1.bf16.msra.mxu0 0
    %1117 = vmatprep.subr.bf16.mxu0 0
    %1118 = vmatpush1.bf16.msra.mxu0 0
    %1119 = vmatprep.subr.bf16.mxu0 0
    %1120 = vmatpush1.bf16.msra.mxu0 0
    %1121 = vmatprep.subr.bf16.mxu0 0
    %1122 = vmatpush1.bf16.msra.mxu0 0
    %1123 = vmatprep.subr.bf16.mxu0 0
    %1124 = vmatpush1.bf16.msra.mxu0 0
    %1125 = vmatprep.subr.bf16.mxu0 0
    %1126 = vmatpush1.bf16.msra.mxu0 0
    %1127 = vmatprep.subr.bf16.mxu0 0
    %1128 = vmatpush1.bf16.msra.mxu0 0
    %1129 = vmatprep.mubr.bf16.mxu0 0
    %1130 = vmatmul.mubr.bf16.gmra.mrb[0].mxu0 %v1096
    %v1131 = vpop.f32.mrb[0].mxu0
    %v1132 = vadd.f32 0.0, %v1131
    %v1133 = vpop.f32.mrb[0].mxu0
    %v1134 = vpop.f32.mrb[0].mxu0
    %v1135 = vpop.f32.mrb[0].mxu0
    %1136 = vdwg.mxu0
    %s1137 = scalar_lea.vmem [#allocation3], 32
    %v1138 = vld [vmem:[%s1137] sm:$0xff]
    %v1139 = vadd.f32 %v1138, %v1132
    %v1140 = vtanh.pop %v1139
    %1141 = vst [vmem:[%s1137] sm:$0xff] %v1140
    %v1142 = vpack.c.bf16 %v1140, %v1140
    %1143 = vmatprep.subr.bf16.mxu0 0
    %1144 = vmatpush1.bf16.msra.mxu0 %v898
    %1145 = vmatprep.subr.bf16.mxu0 0
    %1146 = vmatpush1.bf16.msra.mxu0 %v899
    %1147 = vmatprep.subr.bf16.mxu0 0
    %1148 = vmatpush1.bf16.msra.mxu0 %v900
    %1149 = vmatprep.subr.bf16.mxu0 0
    %1150 = vmatpush1.bf16.msra.mxu0 %v901
    %1151 = vmatprep.subr.bf16.mxu0 0
    %1152 = vmatpush1.bf16.msra.mxu0 %v902
    %1153 = vmatprep.subr.bf16.mxu0 0
    %1154 = vmatpush1.bf16.msra.mxu0 %v903
    %1155 = vmatprep.subr.bf16.mxu0 0
    %1156 = vmatpush1.bf16.msra.mxu0 %v904
    %1157 = vmatprep.subr.bf16.mxu0 0
    %1158 = vmatpush1.bf16.msra.mxu0 %v905
    %1159 = vmatprep.subr.bf16.mxu0 0
    %1160 = vmatpush1.bf16.msra.mxu0 0
    %1161 = vmatprep.subr.bf16.mxu0 0
    %1162 = vmatpush1.bf16.msra.mxu0 0
    %1163 = vmatprep.subr.bf16.mxu0 0
    %1164 = vmatpush1.bf16.msra.mxu0 0
    %1165 = vmatprep.subr.bf16.mxu0 0
    %1166 = vmatpush1.bf16.msra.mxu0 0
    %1167 = vmatprep.subr.bf16.mxu0 0
    %1168 = vmatpush1.bf16.msra.mxu0 0
    %1169 = vmatprep.subr.bf16.mxu0 0
    %1170 = vmatpush1.bf16.msra.mxu0 0
    %1171 = vmatprep.subr.bf16.mxu0 0
    %1172 = vmatpush1.bf16.msra.mxu0 0
    %1173 = vmatprep.subr.bf16.mxu0 0
    %1174 = vmatpush1.bf16.msra.mxu0 0
    %1175 = vmatprep.mubr.bf16.mxu0 0
    %1176 = vmatmul.mubr.bf16.gmra.mrb[0].mxu0 %v1142
    %v1177 = vpop.f32.mrb[0].mxu0
    %v1178 = vadd.f32 0.0, %v1177
    %v1179 = vpop.f32.mrb[0].mxu0
    %v1180 = vpop.f32.mrb[0].mxu0
    %v1181 = vpop.f32.mrb[0].mxu0
    %1182 = vdwg.mxu0
    %s1183 = scalar_lea.vmem [#allocation3], 40
    %v1184 = vld [vmem:[%s1183] sm:$0xff]
    %v1185 = vadd.f32 %v1184, %v1178
    %v1186 = vtanh.pop %v1185
    %1187 = vst [vmem:[%s1183] sm:$0xff] %v1186
    %v1188 = vpack.c.bf16 %v1186, %v1186
    %1189 = vmatprep.subr.bf16.mxu0 0
    %1190 = vmatpush1.bf16.msra.mxu0 %v898
    %1191 = vmatprep.subr.bf16.mxu0 0
    %1192 = vmatpush1.bf16.msra.mxu0 %v899
    %1193 = vmatprep.subr.bf16.mxu0 0
    %1194 = vmatpush1.bf16.msra.mxu0 %v900
    %1195 = vmatprep.subr.bf16.mxu0 0
    %1196 = vmatpush1.bf16.msra.mxu0 %v901
    %1197 = vmatprep.subr.bf16.mxu0 0
    %1198 = vmatpush1.bf16.msra.mxu0 %v902
    %1199 = vmatprep.subr.bf16.mxu0 0
    %1200 = vmatpush1.bf16.msra.mxu0 %v903
    %1201 = vmatprep.subr.bf16.mxu0 0
    %1202 = vmatpush1.bf16.msra.mxu0 %v904
    %1203 = vmatprep.subr.bf16.mxu0 0
    %1204 = vmatpush1.bf16.msra.mxu0 %v905
    %1205 = vmatprep.subr.bf16.mxu0 0
    %1206 = vmatpush1.bf16.msra.mxu0 0
    %1207 = vmatprep.subr.bf16.mxu0 0
    %1208 = vmatpush1.bf16.msra.mxu0 0
    %1209 = vmatprep.subr.bf16.mxu0 0
    %1210 = vmatpush1.bf16.msra.mxu0 0
    %1211 = vmatprep.subr.bf16.mxu0 0
    %1212 = vmatpush1.bf16.msra.mxu0 0
    %1213 = vmatprep.subr.bf16.mxu0 0
    %1214 = vmatpush1.bf16.msra.mxu0 0
    %1215 = vmatprep.subr.bf16.mxu0 0
    %1216 = vmatpush1.bf16.msra.mxu0 0
    %1217 = vmatprep.subr.bf16.mxu0 0
    %1218 = vmatpush1.bf16.msra.mxu0 0
    %1219 = vmatprep.subr.bf16.mxu0 0
    %1220 = vmatpush1.bf16.msra.mxu0 0
    %1221 = vmatprep.mubr.bf16.mxu0 0
    %1222 = vmatmul.mubr.bf16.gmra.mrb[0].mxu0 %v1188
    %v1223 = vpop.f32.mrb[0].mxu0
    %v1224 = vadd.f32 0.0, %v1223
    %v1225 = vpop.f32.mrb[0].mxu0
    %v1226 = vpop.f32.mrb[0].mxu0
    %v1227 = vpop.f32.mrb[0].mxu0
    %1228 = vdwg.mxu0
    %s1229 = scalar_lea.vmem [#allocation3], 48
    %v1230 = vld [vmem:[%s1229] sm:$0xff]
    %v1231 = vadd.f32 %v1230, %v1224
    %v1232 = vtanh.pop %v1231
    %1233 = vst [vmem:[%s1229] sm:$0xff] %v1232
    %v1234 = vpack.c.bf16 %v1232, %v1232
    %1235 = vmatprep.subr.bf16.mxu0 0
    %1236 = vmatpush1.bf16.msra.mxu0 %v898
    %1237 = vmatprep.subr.bf16.mxu0 0
    %1238 = vmatpush1.bf16.msra.mxu0 %v899
    %1239 = vmatprep.subr.bf16.mxu0 0
    %1240 = vmatpush1.bf16.msra.mxu0 %v900
    %1241 = vmatprep.subr.bf16.mxu0 0
    %1242 = vmatpush1.bf16.msra.mxu0 %v901
    %1243 = vmatprep.subr.bf16.mxu0 0
    %1244 = vmatpush1.bf16.msra.mxu0 %v902
    %1245 = vmatprep.subr.bf16.mxu0 0
    %1246 = vmatpush1.bf16.msra.mxu0 %v903
    %1247 = vmatprep.subr.bf16.mxu0 0
    %1248 = vmatpush1.bf16.msra.mxu0 %v904
    %1249 = vmatprep.subr.bf16.mxu0 0
    %1250 = vmatpush1.bf16.msra.mxu0 %v905
    %1251 = vmatprep.subr.bf16.mxu0 0
    %1252 = vmatpush1.bf16.msra.mxu0 0
    %1253 = vmatprep.subr.bf16.mxu0 0
    %1254 = vmatpush1.bf16.msra.mxu0 0
    %1255 = vmatprep.subr.bf16.mxu0 0
    %1256 = vmatpush1.bf16.msra.mxu0 0
    %1257 = vmatprep.subr.bf16.mxu0 0
    %1258 = vmatpush1.bf16.msra.mxu0 0
    %1259 = vmatprep.subr.bf16.mxu0 0
    %1260 = vmatpush1.bf16.msra.mxu0 0
    %1261 = vmatprep.subr.bf16.mxu0 0
    %1262 = vmatpush1.bf16.msra.mxu0 0
    %1263 = vmatprep.subr.bf16.mxu0 0
    %1264 = vmatpush1.bf16.msra.mxu0 0
    %1265 = vmatprep.subr.bf16.mxu0 0
    %1266 = vmatpush1.bf16.msra.mxu0 0
    %1267 = vmatprep.mubr.bf16.mxu0 0
    %1268 = vmatmul.mubr.bf16.gmra.mrb[0].mxu0 %v1234
    %v1269 = vpop.f32.mrb[0].mxu0
    %v1270 = vadd.f32 0.0, %v1269
    %v1271 = vpop.f32.mrb[0].mxu0
    %v1272 = vpop.f32.mrb[0].mxu0
    %v1273 = vpop.f32.mrb[0].mxu0
    %1274 = vdwg.mxu0
    %s1275 = scalar_lea.vmem [#allocation3], 56
    %v1276 = vld [vmem:[%s1275] sm:$0xff]
    %v1277 = vadd.f32 %v1276, %v1270
    %v1278 = vtanh.pop %v1277
    %1279 = vst [vmem:[%s1275] sm:$0xff] %v1278
    %v1280 = vpack.c.bf16 %v1278, %v1278
    %v1281 = vld [vmem:[#allocation9] sm:$0xf]
    %v1282 = vld [vmem:[#allocation9 + $0x4] sm:$0xf]
    %v1283 = vld [vmem:[#allocation9 + $0x8] sm:$0xf]
    %v1284 = vld [vmem:[#allocation9 + $0xc] sm:$0xf]
    %v1285 = vld [vmem:[#allocation9 + $0x10] sm:$0xf]
    %v1286 = vld [vmem:[#allocation9 + $0x14] sm:$0xf]
    %v1287 = vld [vmem:[#allocation9 + $0x18] sm:$0xf]
    %v1288 = vld [vmem:[#allocation9 + $0x1c] sm:$0xf]
    %v1289 = vld [vmem:[#allocation9 + $0x20] sm:$0xf]
    %v1290 = vld [vmem:[#allocation9 + $0x24] sm:$0xf]
    %v1291 = vld [vmem:[#allocation9 + $0x28] sm:$0xf]
    %v1292 = vld [vmem:[#allocation9 + $0x2c] sm:$0xf]
    %v1293 = vld [vmem:[#allocation9 + $0x30] sm:$0xf]
    %v1294 = vld [vmem:[#allocation9 + $0x34] sm:$0xf]
    %v1295 = vld [vmem:[#allocation9 + $0x38] sm:$0xf]
    %v1296 = vld [vmem:[#allocation9 + $0x3c] sm:$0xf]
    %v1297 = vld [vmem:[%s8] sm:$0x1]
    %v1299 = vlaneseq
    %v1300 = vshrl.u32 %v1299, 7
    %v1301 = vsub.s32 0, %v1300
    %v1302 = vrot.slane %v1297, %v1301
    %v1320 = vunpack.c.l.b16 %v1281
    %v1321 = vunpack.c.l.b16 %v1282
    %v1322 = vunpack.c.l.b16 %v1283
    %v1323 = vunpack.c.l.b16 %v1284
    %v1324 = vunpack.c.l.b16 %v1285
    %v1325 = vunpack.c.l.b16 %v1286
    %v1326 = vunpack.c.l.b16 %v1287
    %v1327 = vunpack.c.l.b16 %v1288
    %v1328 = vunpack.c.l.b16 %v1289
    %v1329 = vunpack.c.l.b16 %v1290
    %v1330 = vunpack.c.l.b16 %v1291
    %v1331 = vunpack.c.l.b16 %v1292
    %v1332 = vunpack.c.l.b16 %v1293
    %v1333 = vunpack.c.l.b16 %v1294
    %v1334 = vunpack.c.l.b16 %v1295
    %v1335 = vunpack.c.l.b16 %v1296
    %v1336 = vpack.c.b16 %v1321, %v1320
    %v1337 = vpack.c.b16 %v1323, %v1322
    %v1338 = vpack.c.b16 %v1325, %v1324
    %v1339 = vpack.c.b16 %v1327, %v1326
    %v1340 = vpack.c.b16 %v1329, %v1328
    %v1341 = vpack.c.b16 %v1331, %v1330
    %v1342 = vpack.c.b16 %v1333, %v1332
    %v1343 = vpack.c.b16 %v1335, %v1334
    %1352 = vmatprep.subr.bf16.mxu0 0
    %1353 = vmatpush1.bf16.msra.mxu0 %v1336
    %1354 = vmatprep.subr.bf16.mxu0 0
    %1355 = vmatpush1.bf16.msra.mxu0 %v1337
    %1356 = vmatprep.subr.bf16.mxu0 0
    %1357 = vmatpush1.bf16.msra.mxu0 %v1338
    %1358 = vmatprep.subr.bf16.mxu0 0
    %1359 = vmatpush1.bf16.msra.mxu0 %v1339
    %1360 = vmatprep.subr.bf16.mxu0 0
    %1361 = vmatpush1.bf16.msra.mxu0 %v1340
    %1362 = vmatprep.subr.bf16.mxu0 0
    %1363 = vmatpush1.bf16.msra.mxu0 %v1341
    %1364 = vmatprep.subr.bf16.mxu0 0
    %1365 = vmatpush1.bf16.msra.mxu0 %v1342
    %1366 = vmatprep.subr.bf16.mxu0 0
    %1367 = vmatpush1.bf16.msra.mxu0 %v1343
    %1368 = vmatprep.subr.bf16.mxu0 0
    %1369 = vmatpush1.bf16.msra.mxu0 0
    %1370 = vmatprep.subr.bf16.mxu0 0
    %1371 = vmatpush1.bf16.msra.mxu0 0
    %1372 = vmatprep.subr.bf16.mxu0 0
    %1373 = vmatpush1.bf16.msra.mxu0 0
    %1374 = vmatprep.subr.bf16.mxu0 0
    %1375 = vmatpush1.bf16.msra.mxu0 0
    %1376 = vmatprep.subr.bf16.mxu0 0
    %1377 = vmatpush1.bf16.msra.mxu0 0
    %1378 = vmatprep.subr.bf16.mxu0 0
    %1379 = vmatpush1.bf16.msra.mxu0 0
    %1380 = vmatprep.subr.bf16.mxu0 0
    %1381 = vmatpush1.bf16.msra.mxu0 0
    %1382 = vmatprep.subr.bf16.mxu0 0
    %1383 = vmatpush1.bf16.msra.mxu0 0
    %1384 = vmatprep.mubr.bf16.mxu0 0
    %1385 = vmatmul.mubr.bf16.gmra.mrb[0].mxu0 %v1280
    %v1386 = vpop.f32.mrb[0].mxu0
    %v1387 = vadd.f32 %v1302, %v1386
    %v1388 = vpop.f32.mrb[0].mxu0
    %v1389 = vpop.f32.mrb[0].mxu0
    %v1390 = vpop.f32.mrb[0].mxu0
    %1391 = vdwg.mxu0
    %1392 = vst [vmem:[%s9] sm:$0xff] %v1387
    // Predicated region
    $region54: #{rnn_forward.1} parent=1 // pred_check
      _
    $region55: #{rnn_forward.1} parent=1 // pred_check_branch
      %1394 = sbr.rel (0) target = $region57
    $region56: #{rnn_forward.1} parent=1 // pred_region
      _
    $region57: #{rnn_forward.1} parent=1 // pred_fallthru
      _
    // Predicated region
    $region58: #{rnn_forward.1} parent=1 // pred_check
      _
    $region59: #{rnn_forward.1} parent=1 // pred_check_branch
      %1396 = sbr.rel (0) target = $region61
    $region60: #{rnn_forward.1} parent=1 // pred_region
      _
    $region61: #{rnn_forward.1} parent=1 // pred_fallthru
      _
    %1397 = vsyncpa [#allocation5], 1
    %1398 = vsyncpa [#allocation7], 1
    %1399 = vsyncpa [#allocation10], 1

</llo_original>
